<compile_context>
chip_gen: v5e
topology: v5e:2x2
jax: 0.10.0
libtpu: 0.0.40
codegen_flags: <defaults>
</compile_context>

<pallas_src>
import functools

import jax
import jax.numpy as jnp
from jax import lax
from jax.experimental import pallas as pl
from jax.experimental.pallas import tpu as pltpu

EPS = 1e-5
DILATIONS = (1, 2, 4)
MAX_PAD = 4  # covers the largest dilation


def _fusion_kernel(x_ref, wb_ref, bs_ref, wf_ref, fs_ref, o_ref, patch_ref,
                   *, C, H, Wp, pad, dilations):
    """One batch image per grid step.

    x_ref    : (1, C, Hp*Wp + 2*pad)  flattened zero-padded image (+lane margin)
    wb_ref   : (3C, 27C)              block-diag im2col conv weights (BN folded)
    bs_ref   : (3C, 1)                folded branch BN shift (incl. conv bias)
    wf_ref   : (C, 3C)                1x1 fusion weight (final BN scale folded)
    fs_ref   : (C, 1)                 folded fusion BN shift (incl. bias)
    o_ref    : (1, C, H*Wp)           output band (W padding cropped by wrapper)
    patch_ref: (27C, H*Wp)            VMEM scratch for the im2col patch matrix
    """
    n_out = H * Wp                    # lane dim of the compute (lane-dense)
    base = pad * (Wp + 1)             # lane offset of output pixel (h=0, w=0)
    xw = x_ref[0].astype(jnp.float32)  # (C, Hp*Wp + 2*pad)

    # ---- in-kernel im2col: 27 static contiguous lane-offset slices ----------
    i = 0
    for d in dilations:
        for ky in range(3):
            for kx in range(3):
                off = (ky - 1) * d * Wp + (kx - 1) * d
                s = base + off        # static; always within [0, 2*pad*(Wp+1)]
                patch_ref[i * C:(i + 1) * C, :] = xw[:, s:s + n_out]
                i += 1

    # ---- all three dilated 3x3 convs in ONE matmul (M=3C, K=27C, N=H*Wp) ----
    br = jnp.dot(wb_ref[...], patch_ref[...],
                 preferred_element_type=jnp.float32)          # (3C, n_out)
    br = jnp.maximum(br + bs_ref[...], 0.0)                   # folded BN + ReLU

    # ---- 1x1 fusion conv (M=C, K=3C) + folded BN + ReLU ---------------------
    out = jnp.dot(wf_ref[...], br, preferred_element_type=jnp.float32)
    out = jnp.maximum(out + fs_ref[...], 0.0)                 # (C, n_out)
    o_ref[0] = out.astype(o_ref.dtype)


def multi_scale_fusion(x_nchw, kernel_params):
    """Pallas implementation; input/output are NCHW like the PyTorch module."""
    wb, bshift, wf, fshift = kernel_params
    B, C, H, W = x_nchw.shape
    P = MAX_PAD
    Hp, Wp = H + 2 * P, W + 2 * P
    width = Hp * Wp + 2 * P           # flattened padded image + lane margin
    n_out = H * Wp

    # NCHW -> zero-pad spatial -> flatten (Hp, Wp) into the lane axis, with an
    # extra zero margin of P lanes on each side so every im2col tap inside the
    # kernel is a static, in-bounds, contiguous lane slice (no strided slices).
    x_pad = jnp.pad(x_nchw, ((0, 0), (0, 0), (P, P), (P, P)))
    x_flat = jnp.pad(x_pad.reshape(B, C, Hp * Wp), ((0, 0), (0, 0), (P, P)))

    kernel = functools.partial(_fusion_kernel, C=C, H=H, Wp=Wp, pad=P,
                               dilations=DILATIONS)
    out_flat = pl.pallas_call(
        kernel,
        out_shape=jax.ShapeDtypeStruct((B, C, n_out), x_nchw.dtype),
        grid_spec=pltpu.PrefetchScalarGridSpec(
            num_scalar_prefetch=0,
            grid=(B,),
            in_specs=[
                pl.BlockSpec((1, C, width), lambda b: (b, 0, 0)),
                # Parameters: constant block index every grid step.
                # TODO(synk): at large C, drop their double-buffering
                # (pipeline_mode=pl.Buffered(1) / one-shot scratch copy).
                pl.BlockSpec((3 * C, 27 * C), lambda b: (0, 0)),
                pl.BlockSpec((3 * C, 1), lambda b: (0, 0)),
                pl.BlockSpec((C, 3 * C), lambda b: (0, 0)),
                pl.BlockSpec((C, 1), lambda b: (0, 0)),
            ],
            out_specs=pl.BlockSpec((1, C, n_out), lambda b: (b, 0, 0)),
            scratch_shapes=[pltpu.VMEM((27 * C, n_out), jnp.float32)],
        ),
        compiler_params=pltpu.CompilerParams(
            dimension_semantics=("parallel",)),
    )(x_flat, wb, bshift, wf, fshift)

    # Crop the W padding and return NCHW (layout plumbing only).
    return out_flat.reshape(B, C, H, Wp)[:, :, :, P:P + W]


def make_params(channels, key):
    """Deterministic synthetic parameters matching nn.Module __init__ shapes."""
    C = channels
    ks = jax.random.split(key, 12)
    # three 3x3 branch convs, torch layout (cout, cin, kh, kw)
    conv_w = 0.2 * jax.random.normal(ks[0], (3, C, C, 3, 3), jnp.float32)
    conv_b = 0.1 * jax.random.normal(ks[1], (3, C), jnp.float32)
    # branch BatchNorms (eval-mode running stats + affine)
    bn_gamma = 1.0 + 0.1 * jax.random.normal(ks[2], (3, C), jnp.float32)
    bn_beta = 0.1 * jax.random.normal(ks[3], (3, C), jnp.float32)
    bn_mean = 0.1 * jax.random.normal(ks[4], (3, C), jnp.float32)
    bn_var = 0.5 + jax.nn.softplus(jax.random.normal(ks[5], (3, C), jnp.float32))
    # 1x1 fusion conv, torch layout (cout, 3*cin, 1, 1)
    fusion_w = 0.2 * jax.random.normal(ks[6], (C, 3 * C, 1, 1), jnp.float32)
    fusion_b = 0.1 * jax.random.normal(ks[7], (C,), jnp.float32)
    # final BatchNorm
    fbn_gamma = 1.0 + 0.1 * jax.random.normal(ks[8], (C,), jnp.float32)
    fbn_beta = 0.1 * jax.random.normal(ks[9], (C,), jnp.float32)
    fbn_mean = 0.1 * jax.random.normal(ks[10], (C,), jnp.float32)
    fbn_var = 0.5 + jax.nn.softplus(jax.random.normal(ks[11], (C,), jnp.float32))

    raw = dict(conv_w=conv_w, conv_b=conv_b, bn_gamma=bn_gamma, bn_beta=bn_beta,
               bn_mean=bn_mean, bn_var=bn_var, fusion_w=fusion_w,
               fusion_b=fusion_b, fbn_gamma=fbn_gamma, fbn_beta=fbn_beta,
               fbn_mean=fbn_mean, fbn_var=fbn_var)

    # ---- kernel-side preprocessing (plain-JAX glue) ----
    # Fold the branch BN scale directly into the conv weights.
    bscale = bn_gamma / jnp.sqrt(bn_var + EPS)                     # (3, C)
    w_scaled = conv_w * bscale[:, :, None, None, None]             # (3,Co,Ci,3,3)
    # -> (branch, Cout, ky, kx, Cin) -> (branch, Cout, 9*Cin); column index is
    # (ky*3 + kx)*C + ci, matching the in-kernel tap ordering.
    w_r = jnp.transpose(w_scaled, (0, 1, 3, 4, 2)).reshape(3, C, 9 * C)
    # Block-diagonal (3C, 27C): all three branch convs as a single matmul.
    wb = jnp.zeros((3 * C, 27 * C), jnp.float32)
    for b in range(3):
        wb = wb.at[b * C:(b + 1) * C, b * 9 * C:(b + 1) * 9 * C].set(w_r[b])
    bshift = (bn_beta + (conv_b - bn_mean) * bscale).reshape(3 * C, 1)

    # Fold the fusion bias + final BN into the 1x1 weights / a shift.
    fscale = fbn_gamma / jnp.sqrt(fbn_var + EPS)                   # (C,)
    wf = fusion_w[:, :, 0, 0] * fscale[:, None]                    # (C, 3C)
    fshift = (fbn_beta + (fusion_b - fbn_mean) * fscale).reshape(C, 1)

    kernel_params = (wb, bshift, wf, fshift)
    return raw, kernel_params


def reference(x_nchw, raw):
    """Plain-JAX reference mirroring the PyTorch forward (BN in eval mode)."""
    x = jnp.transpose(x_nchw, (0, 2, 3, 1))  # NHWC
    branches = []
    for bi, d in enumerate(DILATIONS):
        w_hwio = jnp.transpose(raw["conv_w"][bi], (2, 3, 1, 0))  # (3,3,cin,cout)
        y = lax.conv_general_dilated(
            x, w_hwio, window_strides=(1, 1), padding=[(d, d), (d, d)],
            rhs_dilation=(d, d), dimension_numbers=("NHWC", "HWIO", "NHWC"))
        y = y + raw["conv_b"][bi]
        y = ((y - raw["bn_mean"][bi]) / jnp.sqrt(raw["bn_var"][bi] + EPS)
             * raw["bn_gamma"][bi] + raw["bn_beta"][bi])
        branches.append(jnp.maximum(y, 0.0))
    cat = jnp.concatenate(branches, axis=-1)                      # (..., 3C)
    fw_hwio = jnp.transpose(raw["fusion_w"], (2, 3, 1, 0))        # (1,1,3C,C)
    y = lax.conv_general_dilated(
        cat, fw_hwio, window_strides=(1, 1), padding=[(0, 0), (0, 0)],
        dimension_numbers=("NHWC", "HWIO", "NHWC")) + raw["fusion_b"]
    y = ((y - raw["fbn_mean"]) / jnp.sqrt(raw["fbn_var"] + EPS)
         * raw["fbn_gamma"] + raw["fbn_beta"])
    y = jnp.maximum(y, 0.0)
    return jnp.transpose(y, (0, 3, 1, 2))  # NCHW


if __name__ == "__main__":
    key = jax.random.PRNGKey(0)
    k_x, k_p = jax.random.split(key)

    B, C, H, W = 2, 4, 16, 16
    x = jax.random.normal(k_x, (B, C, H, W), jnp.float32)

    raw, kernel_params = make_params(C, k_p)

    out = multi_scale_fusion(x, kernel_params)
    out = jax.block_until_ready(out)

    ref = jax.block_until_ready(reference(x, raw))
    assert out.shape == (B, C, H, W)
    assert jnp.allclose(out, ref, rtol=1e-4, atol=1e-4), (
        float(jnp.max(jnp.abs(out - ref))))

    print("KERNEL_OK")
</pallas_src>

<mosaic_0001>
module attributes {stable_mosaic.version = 11 : i64} {
  func.func @_fusion_kernel(%arg0: i32, %arg1: memref<1x4x584xf32, #tpu.memory_space<vmem>>, %arg2: memref<12x108xf32, #tpu.memory_space<vmem>>, %arg3: memref<12x1xf32, #tpu.memory_space<vmem>>, %arg4: memref<4x12xf32, #tpu.memory_space<vmem>>, %arg5: memref<4x1xf32, #tpu.memory_space<vmem>>, %arg6: memref<1x4x384xf32, #tpu.memory_space<vmem>>, %arg7: memref<108x384xf32, #tpu.memory_space<vmem>>) attributes {dimension_semantics = [#tpu.dimension_semantics<parallel>], iteration_bounds = array<i64: 2>, scalar_prefetch = 0 : i64, scratch_operands = 1 : i64, tpu.core_type = #tpu.core_type<tc>, window_params = [{transform_indices = @transform_0, window_bounds = array<i64: 1, 4, 584>}, {pipeline_mode = #tpu.pipeline_mode<synchronous>, transform_indices = @transform_1, window_bounds = array<i64: 12, 108>}, {pipeline_mode = #tpu.pipeline_mode<synchronous>, transform_indices = @transform_2, window_bounds = array<i64: 12, 1>}, {pipeline_mode = #tpu.pipeline_mode<synchronous>, transform_indices = @transform_3, window_bounds = array<i64: 4, 12>}, {pipeline_mode = #tpu.pipeline_mode<synchronous>, transform_indices = @transform_4, window_bounds = array<i64: 4, 1>}, {transform_indices = @transform_5, window_bounds = array<i64: 1, 4, 384>}]} {
    %c0 = arith.constant 0 : index
    %c0_0 = arith.constant 0 : index
    %c0_1 = arith.constant 0 : index
    %0 = vector.load %arg1[%c0, %c0_0, %c0_1] : memref<1x4x584xf32, #tpu.memory_space<vmem>>, vector<1x4x584xf32>
    %1 = vector.shape_cast %0 : vector<1x4x584xf32> to vector<4x584xf32>
    %2 = vector.extract_strided_slice %1 {offsets = [0, 75], sizes = [4, 384], strides = [1, 1]} : vector<4x584xf32> to vector<4x384xf32>
    %c0_2 = arith.constant 0 : index
    %c0_3 = arith.constant 0 : index
    %3 = vector.load %arg7[%c0_2, %c0_3] : memref<108x384xf32, #tpu.memory_space<vmem>>, vector<4x384xf32>
    tpu.vector_store %arg7[%c0_2, %c0_3], %2 {strides = array<i32>} : memref<108x384xf32, #tpu.memory_space<vmem>>, vector<4x384xf32>,
    %4 = vector.extract_strided_slice %1 {offsets = [0, 76], sizes = [4, 384], strides = [1, 1]} : vector<4x584xf32> to vector<4x384xf32>
    %c4 = arith.constant 4 : index
    %c0_4 = arith.constant 0 : index
    %5 = vector.load %arg7[%c4, %c0_4] : memref<108x384xf32, #tpu.memory_space<vmem>>, vector<4x384xf32>
    tpu.vector_store %arg7[%c4, %c0_4], %4 {strides = array<i32>} : memref<108x384xf32, #tpu.memory_space<vmem>>, vector<4x384xf32>,
    %6 = vector.extract_strided_slice %1 {offsets = [0, 77], sizes = [4, 384], strides = [1, 1]} : vector<4x584xf32> to vector<4x384xf32>
    %c8 = arith.constant 8 : index
    %c0_5 = arith.constant 0 : index
    %7 = vector.load %arg7[%c8, %c0_5] : memref<108x384xf32, #tpu.memory_space<vmem>>, vector<4x384xf32>
    tpu.vector_store %arg7[%c8, %c0_5], %6 {strides = array<i32>} : memref<108x384xf32, #tpu.memory_space<vmem>>, vector<4x384xf32>,
    %8 = vector.extract_strided_slice %1 {offsets = [0, 99], sizes = [4, 384], strides = [1, 1]} : vector<4x584xf32> to vector<4x384xf32>
    %c12 = arith.constant 12 : index
    %c0_6 = arith.constant 0 : index
    %9 = vector.load %arg7[%c12, %c0_6] : memref<108x384xf32, #tpu.memory_space<vmem>>, vector<4x384xf32>
    tpu.vector_store %arg7[%c12, %c0_6], %8 {strides = array<i32>} : memref<108x384xf32, #tpu.memory_space<vmem>>, vector<4x384xf32>,
    %10 = vector.extract_strided_slice %1 {offsets = [0, 100], sizes = [4, 384], strides = [1, 1]} : vector<4x584xf32> to vector<4x384xf32>
    %c16 = arith.constant 16 : index
    %c0_7 = arith.constant 0 : index
    %11 = vector.load %arg7[%c16, %c0_7] : memref<108x384xf32, #tpu.memory_space<vmem>>, vector<4x384xf32>
    tpu.vector_store %arg7[%c16, %c0_7], %10 {strides = array<i32>} : memref<108x384xf32, #tpu.memory_space<vmem>>, vector<4x384xf32>,
    %12 = vector.extract_strided_slice %1 {offsets = [0, 101], sizes = [4, 384], strides = [1, 1]} : vector<4x584xf32> to vector<4x384xf32>
    %c20 = arith.constant 20 : index
    %c0_8 = arith.constant 0 : index
    %13 = vector.load %arg7[%c20, %c0_8] : memref<108x384xf32, #tpu.memory_space<vmem>>, vector<4x384xf32>
    tpu.vector_store %arg7[%c20, %c0_8], %12 {strides = array<i32>} : memref<108x384xf32, #tpu.memory_space<vmem>>, vector<4x384xf32>,
    %14 = vector.extract_strided_slice %1 {offsets = [0, 123], sizes = [4, 384], strides = [1, 1]} : vector<4x584xf32> to vector<4x384xf32>
    %c24 = arith.constant 24 : index
    %c0_9 = arith.constant 0 : index
    %15 = vector.load %arg7[%c24, %c0_9] : memref<108x384xf32, #tpu.memory_space<vmem>>, vector<4x384xf32>
    tpu.vector_store %arg7[%c24, %c0_9], %14 {strides = array<i32>} : memref<108x384xf32, #tpu.memory_space<vmem>>, vector<4x384xf32>,
    %16 = vector.extract_strided_slice %1 {offsets = [0, 124], sizes = [4, 384], strides = [1, 1]} : vector<4x584xf32> to vector<4x384xf32>
    %c28 = arith.constant 28 : index
    %c0_10 = arith.constant 0 : index
    %17 = vector.load %arg7[%c28, %c0_10] : memref<108x384xf32, #tpu.memory_space<vmem>>, vector<4x384xf32>
    tpu.vector_store %arg7[%c28, %c0_10], %16 {strides = array<i32>} : memref<108x384xf32, #tpu.memory_space<vmem>>, vector<4x384xf32>,
    %18 = vector.extract_strided_slice %1 {offsets = [0, 125], sizes = [4, 384], strides = [1, 1]} : vector<4x584xf32> to vector<4x384xf32>
    %c32 = arith.constant 32 : index
    %c0_11 = arith.constant 0 : index
    %19 = vector.load %arg7[%c32, %c0_11] : memref<108x384xf32, #tpu.memory_space<vmem>>, vector<4x384xf32>
    tpu.vector_store %arg7[%c32, %c0_11], %18 {strides = array<i32>} : memref<108x384xf32, #tpu.memory_space<vmem>>, vector<4x384xf32>,
    %20 = vector.extract_strided_slice %1 {offsets = [0, 50], sizes = [4, 384], strides = [1, 1]} : vector<4x584xf32> to vector<4x384xf32>
    %c36 = arith.constant 36 : index
    %c0_12 = arith.constant 0 : index
    %21 = vector.load %arg7[%c36, %c0_12] : memref<108x384xf32, #tpu.memory_space<vmem>>, vector<4x384xf32>
    tpu.vector_store %arg7[%c36, %c0_12], %20 {strides = array<i32>} : memref<108x384xf32, #tpu.memory_space<vmem>>, vector<4x384xf32>,
    %22 = vector.extract_strided_slice %1 {offsets = [0, 52], sizes = [4, 384], strides = [1, 1]} : vector<4x584xf32> to vector<4x384xf32>
    %c40 = arith.constant 40 : index
    %c0_13 = arith.constant 0 : index
    %23 = vector.load %arg7[%c40, %c0_13] : memref<108x384xf32, #tpu.memory_space<vmem>>, vector<4x384xf32>
    tpu.vector_store %arg7[%c40, %c0_13], %22 {strides = array<i32>} : memref<108x384xf32, #tpu.memory_space<vmem>>, vector<4x384xf32>,
    %24 = vector.extract_strided_slice %1 {offsets = [0, 54], sizes = [4, 384], strides = [1, 1]} : vector<4x584xf32> to vector<4x384xf32>
    %c44 = arith.constant 44 : index
    %c0_14 = arith.constant 0 : index
    %25 = vector.load %arg7[%c44, %c0_14] : memref<108x384xf32, #tpu.memory_space<vmem>>, vector<4x384xf32>
    tpu.vector_store %arg7[%c44, %c0_14], %24 {strides = array<i32>} : memref<108x384xf32, #tpu.memory_space<vmem>>, vector<4x384xf32>,
    %26 = vector.extract_strided_slice %1 {offsets = [0, 98], sizes = [4, 384], strides = [1, 1]} : vector<4x584xf32> to vector<4x384xf32>
    %c48 = arith.constant 48 : index
    %c0_15 = arith.constant 0 : index
    %27 = vector.load %arg7[%c48, %c0_15] : memref<108x384xf32, #tpu.memory_space<vmem>>, vector<4x384xf32>
    tpu.vector_store %arg7[%c48, %c0_15], %26 {strides = array<i32>} : memref<108x384xf32, #tpu.memory_space<vmem>>, vector<4x384xf32>,
    %28 = vector.extract_strided_slice %1 {offsets = [0, 100], sizes = [4, 384], strides = [1, 1]} : vector<4x584xf32> to vector<4x384xf32>
    %c52 = arith.constant 52 : index
    %c0_16 = arith.constant 0 : index
    %29 = vector.load %arg7[%c52, %c0_16] : memref<108x384xf32, #tpu.memory_space<vmem>>, vector<4x384xf32>
    tpu.vector_store %arg7[%c52, %c0_16], %28 {strides = array<i32>} : memref<108x384xf32, #tpu.memory_space<vmem>>, vector<4x384xf32>,
    %30 = vector.extract_strided_slice %1 {offsets = [0, 102], sizes = [4, 384], strides = [1, 1]} : vector<4x584xf32> to vector<4x384xf32>
    %c56 = arith.constant 56 : index
    %c0_17 = arith.constant 0 : index
    %31 = vector.load %arg7[%c56, %c0_17] : memref<108x384xf32, #tpu.memory_space<vmem>>, vector<4x384xf32>
    tpu.vector_store %arg7[%c56, %c0_17], %30 {strides = array<i32>} : memref<108x384xf32, #tpu.memory_space<vmem>>, vector<4x384xf32>,
    %32 = vector.extract_strided_slice %1 {offsets = [0, 146], sizes = [4, 384], strides = [1, 1]} : vector<4x584xf32> to vector<4x384xf32>
    %c60 = arith.constant 60 : index
    %c0_18 = arith.constant 0 : index
    %33 = vector.load %arg7[%c60, %c0_18] : memref<108x384xf32, #tpu.memory_space<vmem>>, vector<4x384xf32>
    tpu.vector_store %arg7[%c60, %c0_18], %32 {strides = array<i32>} : memref<108x384xf32, #tpu.memory_space<vmem>>, vector<4x384xf32>,
    %34 = vector.extract_strided_slice %1 {offsets = [0, 148], sizes = [4, 384], strides = [1, 1]} : vector<4x584xf32> to vector<4x384xf32>
    %c64 = arith.constant 64 : index
    %c0_19 = arith.constant 0 : index
    %35 = vector.load %arg7[%c64, %c0_19] : memref<108x384xf32, #tpu.memory_space<vmem>>, vector<4x384xf32>
    tpu.vector_store %arg7[%c64, %c0_19], %34 {strides = array<i32>} : memref<108x384xf32, #tpu.memory_space<vmem>>, vector<4x384xf32>,
    %36 = vector.extract_strided_slice %1 {offsets = [0, 150], sizes = [4, 384], strides = [1, 1]} : vector<4x584xf32> to vector<4x384xf32>
    %c68 = arith.constant 68 : index
    %c0_20 = arith.constant 0 : index
    %37 = vector.load %arg7[%c68, %c0_20] : memref<108x384xf32, #tpu.memory_space<vmem>>, vector<4x384xf32>
    tpu.vector_store %arg7[%c68, %c0_20], %36 {strides = array<i32>} : memref<108x384xf32, #tpu.memory_space<vmem>>, vector<4x384xf32>,
    %38 = vector.extract_strided_slice %1 {offsets = [0, 0], sizes = [4, 384], strides = [1, 1]} : vector<4x584xf32> to vector<4x384xf32>
    %c72 = arith.constant 72 : index
    %c0_21 = arith.constant 0 : index
    %39 = vector.load %arg7[%c72, %c0_21] : memref<108x384xf32, #tpu.memory_space<vmem>>, vector<4x384xf32>
    tpu.vector_store %arg7[%c72, %c0_21], %38 {strides = array<i32>} : memref<108x384xf32, #tpu.memory_space<vmem>>, vector<4x384xf32>,
    %40 = vector.extract_strided_slice %1 {offsets = [0, 4], sizes = [4, 384], strides = [1, 1]} : vector<4x584xf32> to vector<4x384xf32>
    %c76 = arith.constant 76 : index
    %c0_22 = arith.constant 0 : index
    %41 = vector.load %arg7[%c76, %c0_22] : memref<108x384xf32, #tpu.memory_space<vmem>>, vector<4x384xf32>
    tpu.vector_store %arg7[%c76, %c0_22], %40 {strides = array<i32>} : memref<108x384xf32, #tpu.memory_space<vmem>>, vector<4x384xf32>,
    %42 = vector.extract_strided_slice %1 {offsets = [0, 8], sizes = [4, 384], strides = [1, 1]} : vector<4x584xf32> to vector<4x384xf32>
    %c80 = arith.constant 80 : index
    %c0_23 = arith.constant 0 : index
    %43 = vector.load %arg7[%c80, %c0_23] : memref<108x384xf32, #tpu.memory_space<vmem>>, vector<4x384xf32>
    tpu.vector_store %arg7[%c80, %c0_23], %42 {strides = array<i32>} : memref<108x384xf32, #tpu.memory_space<vmem>>, vector<4x384xf32>,
    %44 = vector.extract_strided_slice %1 {offsets = [0, 96], sizes = [4, 384], strides = [1, 1]} : vector<4x584xf32> to vector<4x384xf32>
    %c84 = arith.constant 84 : index
    %c0_24 = arith.constant 0 : index
    %45 = vector.load %arg7[%c84, %c0_24] : memref<108x384xf32, #tpu.memory_space<vmem>>, vector<4x384xf32>
    tpu.vector_store %arg7[%c84, %c0_24], %44 {strides = array<i32>} : memref<108x384xf32, #tpu.memory_space<vmem>>, vector<4x384xf32>,
    %46 = vector.extract_strided_slice %1 {offsets = [0, 100], sizes = [4, 384], strides = [1, 1]} : vector<4x584xf32> to vector<4x384xf32>
    %c88 = arith.constant 88 : index
    %c0_25 = arith.constant 0 : index
    %47 = vector.load %arg7[%c88, %c0_25] : memref<108x384xf32, #tpu.memory_space<vmem>>, vector<4x384xf32>
    tpu.vector_store %arg7[%c88, %c0_25], %46 {strides = array<i32>} : memref<108x384xf32, #tpu.memory_space<vmem>>, vector<4x384xf32>,
    %48 = vector.extract_strided_slice %1 {offsets = [0, 104], sizes = [4, 384], strides = [1, 1]} : vector<4x584xf32> to vector<4x384xf32>
    %c92 = arith.constant 92 : index
    %c0_26 = arith.constant 0 : index
    %49 = vector.load %arg7[%c92, %c0_26] : memref<108x384xf32, #tpu.memory_space<vmem>>, vector<4x384xf32>
    tpu.vector_store %arg7[%c92, %c0_26], %48 {strides = array<i32>} : memref<108x384xf32, #tpu.memory_space<vmem>>, vector<4x384xf32>,
    %50 = vector.extract_strided_slice %1 {offsets = [0, 192], sizes = [4, 384], strides = [1, 1]} : vector<4x584xf32> to vector<4x384xf32>
    %c96 = arith.constant 96 : index
    %c0_27 = arith.constant 0 : index
    %51 = vector.load %arg7[%c96, %c0_27] : memref<108x384xf32, #tpu.memory_space<vmem>>, vector<4x384xf32>
    tpu.vector_store %arg7[%c96, %c0_27], %50 {strides = array<i32>} : memref<108x384xf32, #tpu.memory_space<vmem>>, vector<4x384xf32>,
    %52 = vector.extract_strided_slice %1 {offsets = [0, 196], sizes = [4, 384], strides = [1, 1]} : vector<4x584xf32> to vector<4x384xf32>
    %c100 = arith.constant 100 : index
    %c0_28 = arith.constant 0 : index
    %53 = vector.load %arg7[%c100, %c0_28] : memref<108x384xf32, #tpu.memory_space<vmem>>, vector<4x384xf32>
    tpu.vector_store %arg7[%c100, %c0_28], %52 {strides = array<i32>} : memref<108x384xf32, #tpu.memory_space<vmem>>, vector<4x384xf32>,
    %54 = vector.extract_strided_slice %1 {offsets = [0, 200], sizes = [4, 384], strides = [1, 1]} : vector<4x584xf32> to vector<4x384xf32>
    %c104 = arith.constant 104 : index
    %c0_29 = arith.constant 0 : index
    %55 = vector.load %arg7[%c104, %c0_29] : memref<108x384xf32, #tpu.memory_space<vmem>>, vector<4x384xf32>
    tpu.vector_store %arg7[%c104, %c0_29], %54 {strides = array<i32>} : memref<108x384xf32, #tpu.memory_space<vmem>>, vector<4x384xf32>,
    %c0_30 = arith.constant 0 : index
    %c0_31 = arith.constant 0 : index
    %56 = vector.load %arg2[%c0_30, %c0_31] : memref<12x108xf32, #tpu.memory_space<vmem>>, vector<12x108xf32>
    %c0_32 = arith.constant 0 : index
    %c0_33 = arith.constant 0 : index
    %57 = vector.load %arg7[%c0_32, %c0_33] : memref<108x384xf32, #tpu.memory_space<vmem>>, vector<108x384xf32>
    %cst = arith.constant dense<0.000000e+00> : vector<12x384xf32>
    %58 = tpu.matmul %56, %57, %cst {dimension_numbers = #tpu.dot_dimension_numbers<[1], [0], [0], [1], [0, 0, 1, 1], [], []>} : vector<12x108xf32>, vector<108x384xf32>, vector<12x384xf32> -> vector<12x384xf32>
    %c0_34 = arith.constant 0 : index
    %c0_35 = arith.constant 0 : index
    %59 = vector.load %arg3[%c0_34, %c0_35] : memref<12x1xf32, #tpu.memory_space<vmem>>, vector<12x1xf32>
    %60 = vector.broadcast %59 : vector<12x1xf32> to vector<12x384xf32>
    %61 = arith.addf %58, %60 : vector<12x384xf32>
    %cst_36 = arith.constant 0.000000e+00 : f32
    %62 = vector.broadcast %cst_36 : f32 to vector<12x384xf32>
    %63 = arith.maximumf %61, %62 : vector<12x384xf32>
    %c0_37 = arith.constant 0 : index
    %c0_38 = arith.constant 0 : index
    %64 = vector.load %arg4[%c0_37, %c0_38] : memref<4x12xf32, #tpu.memory_space<vmem>>, vector<4x12xf32>
    %cst_39 = arith.constant dense<0.000000e+00> : vector<4x384xf32>
    %65 = tpu.matmul %64, %63, %cst_39 {dimension_numbers = #tpu.dot_dimension_numbers<[1], [0], [0], [1], [0, 0, 1, 1], [], []>} : vector<4x12xf32>, vector<12x384xf32>, vector<4x384xf32> -> vector<4x384xf32>
    %c0_40 = arith.constant 0 : index
    %c0_41 = arith.constant 0 : index
    %66 = vector.load %arg5[%c0_40, %c0_41] : memref<4x1xf32, #tpu.memory_space<vmem>>, vector<4x1xf32>
    %67 = vector.broadcast %66 : vector<4x1xf32> to vector<4x384xf32>
    %68 = arith.addf %65, %67 : vector<4x384xf32>
    %cst_42 = arith.constant 0.000000e+00 : f32
    %69 = vector.broadcast %cst_42 : f32 to vector<4x384xf32>
    %70 = arith.maximumf %68, %69 : vector<4x384xf32>
    %c0_43 = arith.constant 0 : index
    %c0_44 = arith.constant 0 : index
    %c0_45 = arith.constant 0 : index
    %71 = vector.load %arg6[%c0_43, %c0_44, %c0_45] : memref<1x4x384xf32, #tpu.memory_space<vmem>>, vector<1x4x384xf32>
    %72 = vector.shape_cast %71 : vector<1x4x384xf32> to vector<4x384xf32>
    %73 = vector.shape_cast %70 : vector<4x384xf32> to vector<1x4x384xf32>
    tpu.vector_store %arg6[%c0_43, %c0_44, %c0_45], %73 {strides = array<i32>} : memref<1x4x384xf32, #tpu.memory_space<vmem>>, vector<1x4x384xf32>,
    return
  }
  func.func @transform_0(%arg0: i32) -> (i32, i32, i32) {
    %c0_i32 = arith.constant 0 : i32
    %c0_i32_0 = arith.constant 0 : i32
    %c0_i32_1 = arith.constant 0 : i32
    return %arg0, %c0_i32, %c0_i32_0 : i32, i32, i32
  }
  func.func @transform_1(%arg0: i32) -> (i32, i32) {
    %c0_i32 = arith.constant 0 : i32
    %c0_i32_0 = arith.constant 0 : i32
    %c0_i32_1 = arith.constant 0 : i32
    return %c0_i32, %c0_i32_0 : i32, i32
  }
  func.func @transform_2(%arg0: i32) -> (i32, i32) {
    %c0_i32 = arith.constant 0 : i32
    %c0_i32_0 = arith.constant 0 : i32
    %c0_i32_1 = arith.constant 0 : i32
    return %c0_i32, %c0_i32_0 : i32, i32
  }
  func.func @transform_3(%arg0: i32) -> (i32, i32) {
    %c0_i32 = arith.constant 0 : i32
    %c0_i32_0 = arith.constant 0 : i32
    %c0_i32_1 = arith.constant 0 : i32
    return %c0_i32, %c0_i32_0 : i32, i32
  }
  func.func @transform_4(%arg0: i32) -> (i32, i32) {
    %c0_i32 = arith.constant 0 : i32
    %c0_i32_0 = arith.constant 0 : i32
    %c0_i32_1 = arith.constant 0 : i32
    return %c0_i32, %c0_i32_0 : i32, i32
  }
  func.func @transform_5(%arg0: i32) -> (i32, i32, i32) {
    %c0_i32 = arith.constant 0 : i32
    %c0_i32_0 = arith.constant 0 : i32
    %c0_i32_1 = arith.constant 0 : i32
    return %arg0, %c0_i32, %c0_i32_0 : i32, i32, i32
  }
}

</mosaic_0001>

<llo_original>
// kernel: tpu_custom_call.1
$region0: #{tpu_custom_call.1}
  #allocation0 [shape = 'u32[]', space=smem, size = 0x4, offset = 0x4, fixed_abs, tag = 'smem constant byte address 0x4 - core index']
  #allocation1 [shape = 'u32[72,128]{1,0:T(1,128)}', space=vmem, size = 0x9000, scoped, tag = 'internal scratch']
  #allocation2 [shape = 'f32[108,384]{1,0:T(8,128)}', space=vmem, size = 0x2a000, scoped, tag = 'scratch operand']
  %s0 = inlined_call_operand.hbm [shape: f32[2,4,584], index: 0, kind: input, shape index: {}]
  %s1 = inlined_call_operand.vmem [shape: f32[12,108], index: 1, kind: input, shape index: {}]
  %s2 = inlined_call_operand.vmem [shape: f32[12,1], index: 2, kind: input, shape index: {}]
  %s3 = inlined_call_operand.vmem [shape: f32[4,12], index: 3, kind: input, shape index: {}]
  %s4 = inlined_call_operand.vmem [shape: f32[4,1], index: 4, kind: input, shape index: {}]
  %s5 = inlined_call_operand.hbm [shape: f32[2,4,384], index: 5, kind: output, shape index: {}]
  %s6 = sld [smem:[#allocation0]]
  $region57: #{tpu_custom_call.1} parent=0
    _
  %s8 = ssub.s32 1, %s6
  %s9 = scalar_select 0, %s8, %s6
  $region1: #{tpu_custom_call.1} parent=0
    #allocation3 [shape = 'u8[20480]{0}', space=vmem, size = 0x5000, scoped, tag = 'input window, operand 0']
    #allocation4 [shape = 's32[2]{0}', space=sflag, size = 0x8, scoped, tag = 'scoped memory for tpu_custom_call.1']
    #allocation5 [shape = 's32[2]{0}', space=sflag, size = 0x8, scoped, tag = 'scoped memory for tpu_custom_call.1']
    #allocation6 [shape = 'u8[12288]{0}', space=vmem, size = 0x3000, scoped, tag = 'output window, operand 0']
    %10 = vsyncpa [#allocation4], 0
    %s11 = scalar_lea.sflag [#allocation4], 1
    %12 = vsyncpa %s11, 0
    %13 = vsyncpa [#allocation5], 0
    %s14 = scalar_lea.sflag [#allocation5], 1
    %15 = vsyncpa %s14, 0
    loop: start=0, step=1, limit=4
    $region2: #{tpu_custom_call.1} parent=1 // loop_pre_header
      _
    $region3: #{tpu_custom_call.1} parent=1 // loop_header
      %s17 = sphi 0, %s21
      %p18 = scmp.ge.s32.totalorder %s17, 4
      %s27 = sphi 0, %s29
      %s30 = sphi 0, %s27
      %s31 = sphi 0, %s30
      %s47 = sphi 0, %s31
      %s51 = sphi 0, %s51
      %s53 = sphi 0, %s51
      %s54 = sphi 0, %s53
      %s68 = sphi 0, %s54
      %s72 = sphi 0, %s72
      %s74 = sphi 0, %s72
      %s75 = sphi 0, %s74
      %s89 = sphi 0, %s75
      %s93 = sphi 0, %s93
      %s95 = sphi 0, %s93
      %s96 = sphi 0, %s95
      %s110 = sphi 0, %s96
      %s114 = sphi 0, %s114
      %s116 = sphi 0, %s114
      %s117 = sphi 0, %s116
      %s131 = sphi 0, %s117
      %s137 = sphi 0, %s139
      %s140 = sphi 0, %s137
      %s141 = sphi 0, %s140
      %s157 = sphi 0, %s141
    $region4: #{tpu_custom_call.1} parent=1 // loop_header_branch
      %20 = sbr.rel (%p18) target = $region8
    $region5: #{tpu_custom_call.1} parent=1 // loop_body
      %s22 = ssub.s32 %s17, 1
      %s23 = ssub.s32 %s17, 2
      %s24 = sadd.s32 %s17, 1
      %s25 = ssub.s32 %s17, %s24
      %p26 = scmp.eq.s32.totalorder %s25, 0
      %s28 = sadd.s32 %s27, 1
      %s29 = scalar_select %p26, %s27, %s28
      %p32 = pneg %p26
      %p33 = scmp.eq.s32.totalorder %s17, 1
      %p34 = por %p32, %p33
      %p35 = scmp.ne.s32.totalorder %s27, %s30
      %p36 = scmp.eq.s32.totalorder %s17, 0
      %p37 = por %p35, %p36
      %p38 = scmp.ne.s32.totalorder %s27, %s30
      %p39 = scmp.eq.s32.totalorder %s22, 1
      %p40 = por %p38, %p39
      %p41 = scmp.ne.s32.totalorder %s30, %s31
      %p42 = scmp.eq.s32.totalorder %s22, 0
      %p43 = por %p41, %p42
      %p44 = scmp.ne.s32.totalorder %s30, %s31
      %p45 = scmp.eq.s32.totalorder %s23, 1
      %p46 = por %p44, %p45
      %p48 = scmp.ne.s32.totalorder %s31, %s47
      %p49 = scmp.eq.s32.totalorder %s23, 0
      %p50 = por %p48, %p49
      %s52 = sadd.s32 %s51, 1
      %p55 = scmp.eq.s32.totalorder %s17, 1
      %p56 = scmp.ne.s32.totalorder %s51, %s53
      %p57 = scmp.eq.s32.totalorder %s17, 0
      %p58 = por %p56, %p57
      %p59 = scmp.ne.s32.totalorder %s51, %s53
      %p60 = scmp.eq.s32.totalorder %s22, 1
      %p61 = por %p59, %p60
      %p62 = scmp.ne.s32.totalorder %s53, %s54
      %p63 = scmp.eq.s32.totalorder %s22, 0
      %p64 = por %p62, %p63
      %p65 = scmp.ne.s32.totalorder %s53, %s54
      %p66 = scmp.eq.s32.totalorder %s23, 1
      %p67 = por %p65, %p66
      %p69 = scmp.ne.s32.totalorder %s54, %s68
      %p70 = scmp.eq.s32.totalorder %s23, 0
      %p71 = por %p69, %p70
      %s73 = sadd.s32 %s72, 1
      %p76 = scmp.eq.s32.totalorder %s17, 1
      %p77 = scmp.ne.s32.totalorder %s72, %s74
      %p78 = scmp.eq.s32.totalorder %s17, 0
      %p79 = por %p77, %p78
      %p80 = scmp.ne.s32.totalorder %s72, %s74
      %p81 = scmp.eq.s32.totalorder %s22, 1
      %p82 = por %p80, %p81
      %p83 = scmp.ne.s32.totalorder %s74, %s75
      %p84 = scmp.eq.s32.totalorder %s22, 0
      %p85 = por %p83, %p84
      %p86 = scmp.ne.s32.totalorder %s74, %s75
      %p87 = scmp.eq.s32.totalorder %s23, 1
      %p88 = por %p86, %p87
      %p90 = scmp.ne.s32.totalorder %s75, %s89
      %p91 = scmp.eq.s32.totalorder %s23, 0
      %p92 = por %p90, %p91
      %s94 = sadd.s32 %s93, 1
      %p97 = scmp.eq.s32.totalorder %s17, 1
      %p98 = scmp.ne.s32.totalorder %s93, %s95
      %p99 = scmp.eq.s32.totalorder %s17, 0
      %p100 = por %p98, %p99
      %p101 = scmp.ne.s32.totalorder %s93, %s95
      %p102 = scmp.eq.s32.totalorder %s22, 1
      %p103 = por %p101, %p102
      %p104 = scmp.ne.s32.totalorder %s95, %s96
      %p105 = scmp.eq.s32.totalorder %s22, 0
      %p106 = por %p104, %p105
      %p107 = scmp.ne.s32.totalorder %s95, %s96
      %p108 = scmp.eq.s32.totalorder %s23, 1
      %p109 = por %p107, %p108
      %p111 = scmp.ne.s32.totalorder %s96, %s110
      %p112 = scmp.eq.s32.totalorder %s23, 0
      %p113 = por %p111, %p112
      %s115 = sadd.s32 %s114, 1
      %p118 = scmp.eq.s32.totalorder %s17, 1
      %p119 = scmp.ne.s32.totalorder %s114, %s116
      %p120 = scmp.eq.s32.totalorder %s17, 0
      %p121 = por %p119, %p120
      %p122 = scmp.ne.s32.totalorder %s114, %s116
      %p123 = scmp.eq.s32.totalorder %s22, 1
      %p124 = por %p122, %p123
      %p125 = scmp.ne.s32.totalorder %s116, %s117
      %p126 = scmp.eq.s32.totalorder %s22, 0
      %p127 = por %p125, %p126
      %p128 = scmp.ne.s32.totalorder %s116, %s117
      %p129 = scmp.eq.s32.totalorder %s23, 1
      %p130 = por %p128, %p129
      %p132 = scmp.ne.s32.totalorder %s117, %s131
      %p133 = scmp.eq.s32.totalorder %s23, 0
      %p134 = por %p132, %p133
      %s135 = ssub.s32 %s17, %s24
      %p136 = scmp.eq.s32.totalorder %s135, 0
      %s138 = sadd.s32 %s137, 1
      %s139 = scalar_select %p136, %s137, %s138
      %p142 = pneg %p136
      %p143 = scmp.eq.s32.totalorder %s17, 1
      %p144 = por %p142, %p143
      %p145 = scmp.ne.s32.totalorder %s137, %s140
      %p146 = scmp.eq.s32.totalorder %s17, 0
      %p147 = por %p145, %p146
      %p148 = scmp.ne.s32.totalorder %s137, %s140
      %p149 = scmp.eq.s32.totalorder %s22, 1
      %p150 = por %p148, %p149
      %p151 = scmp.ne.s32.totalorder %s140, %s141
      %p152 = scmp.eq.s32.totalorder %s22, 0
      %p153 = por %p151, %p152
      %p154 = scmp.ne.s32.totalorder %s140, %s141
      %p155 = scmp.eq.s32.totalorder %s23, 1
      %p156 = por %p154, %p155
      %p158 = scmp.ne.s32.totalorder %s141, %s157
      %p159 = scmp.eq.s32.totalorder %s23, 0
      %p160 = por %p158, %p159
      %p161 = scmp.le.s32.totalorder 1, %s17
      %p162 = scmp.lt.s32.totalorder %s17, 3
      %p163 = pnand %p161, %p162
      %p164 = pneg %p163
      // Predicated region
      $region9: #{tpu_custom_call.1} parent=5 // pred_check
        _
      $region10: #{tpu_custom_call.1} parent=5 // pred_check_branch
        %166 = sbr.rel (%p163) target = $region12
      $region11: #{tpu_custom_call.1} parent=5 // pred_region
        %s167 = ssub.s32 %s17, 1
        // Predicated region
        $region13: #{tpu_custom_call.1} parent=11 // pred_check
          %p168 = pneg %p64
        $region14: #{tpu_custom_call.1} parent=11 // pred_check_branch
          %170 = sbr.rel (%p168) target = $region16
        $region15: #{tpu_custom_call.1} parent=11 // pred_region
          _
        $region16: #{tpu_custom_call.1} parent=11 // pred_fallthru
          _
        // Predicated region
        $region17: #{tpu_custom_call.1} parent=11 // pred_check
          %p171 = pneg %p85
        $region18: #{tpu_custom_call.1} parent=11 // pred_check_branch
          %173 = sbr.rel (%p171) target = $region20
        $region19: #{tpu_custom_call.1} parent=11 // pred_region
          _
        $region20: #{tpu_custom_call.1} parent=11 // pred_fallthru
          _
        // Predicated region
        $region21: #{tpu_custom_call.1} parent=11 // pred_check
          %p174 = pneg %p106
        $region22: #{tpu_custom_call.1} parent=11 // pred_check_branch
          %176 = sbr.rel (%p174) target = $region24
        $region23: #{tpu_custom_call.1} parent=11 // pred_region
          _
        $region24: #{tpu_custom_call.1} parent=11 // pred_fallthru
          _
        // Predicated region
        $region25: #{tpu_custom_call.1} parent=11 // pred_check
          %p177 = pneg %p127
        $region26: #{tpu_custom_call.1} parent=11 // pred_check_branch
          %179 = sbr.rel (%p177) target = $region28
        $region27: #{tpu_custom_call.1} parent=11 // pred_region
          _
        $region28: #{tpu_custom_call.1} parent=11 // pred_fallthru
          _
      $region12: #{tpu_custom_call.1} parent=5 // pred_fallthru
        _
      %p180 = scmp.lt.s32.totalorder %s17, 2
      // Predicated region
      $region29: #{tpu_custom_call.1} parent=5 // pred_check
        %p181 = pneg %p180
      $region30: #{tpu_custom_call.1} parent=5 // pred_check_branch
        %183 = sbr.rel (%p181) target = $region32
      $region31: #{tpu_custom_call.1} parent=5 // pred_region
        // Predicated region
        $region33: #{tpu_custom_call.1} parent=31 // pred_check
          %p184 = pneg %p37
        $region34: #{tpu_custom_call.1} parent=31 // pred_check_branch
          %186 = sbr.rel (%p184) target = $region36
        $region35: #{tpu_custom_call.1} parent=31 // pred_region
          %s187 = sand.u32 %s27, 1
          %s188 = scalar_lea.sflag [#allocation4], %s187
          %s189 = sand.u32 %s27, 1
          %s190 = smul.addr %s189, 20
          %s191 = scalar_lea.vmem [#allocation3], %s190
          %193 = vsyncadd %s188, 0
          %s194 = smul.addr %s17, 5
          %s195 = smul.addr %s194, 4
          %s196 = scalar_lea.hbm %s0, %s195
          %s198 = sshll.u32 %s196, 4
          %s199 = int_to_ptr.hbm [resolvable:$true] %s198
          %s200 = sshll.u32 %s191, 4
          %s201 = int_to_ptr.vmem [resolvable:$true] %s200
          %203 = dma.hbm_to_vmem [thread:$0]  %s199, 320, %s201, %s188
        $region36: #{tpu_custom_call.1} parent=31 // pred_fallthru
          _
      $region32: #{tpu_custom_call.1} parent=5 // pred_fallthru
        _
      %p204 = scmp.le.s32.totalorder 1, %s17
      %p205 = scmp.lt.s32.totalorder %s17, 3
      %p206 = pnand %p204, %p205
      %p207 = pneg %p206
      // Predicated region
      $region37: #{tpu_custom_call.1} parent=5 // pred_check
        _
      $region38: #{tpu_custom_call.1} parent=5 // pred_check_branch
        %209 = sbr.rel (%p206) target = $region40
      $region39: #{tpu_custom_call.1} parent=5 // pred_region
        %s210 = ssub.s32 %s17, 1
        %s211 = sand.u32 %s30, 1
        %s212 = scalar_lea.sflag [#allocation4], %s211
        %s213 = sand.u32 %s30, 1
        %s214 = smul.addr %s213, 20
        %s215 = scalar_lea.vmem [#allocation3], %s214
        // Predicated region
        $region41: #{tpu_custom_call.1} parent=39 // pred_check
          %p216 = pneg %p43
        $region42: #{tpu_custom_call.1} parent=39 // pred_check_branch
          %218 = sbr.rel (%p216) target = $region44
        $region43: #{tpu_custom_call.1} parent=39 // pred_region
          %220 = dma.done %s212, 320
        $region44: #{tpu_custom_call.1} parent=39 // pred_fallthru
          _
        %s221 = sand.u32 %s30, 1
        %s222 = scalar_lea.sflag [#allocation4], %s221
        %s223 = sand.u32 %s30, 1
        %s224 = smul.addr %s223, 20
        %s225 = scalar_lea.vmem [#allocation3], %s224
        %p226 = pneg %p43
        %p227 = pneg %p40
        %p228 = pneg %p64
        %p229 = pneg %p61
        %p230 = pneg %p85
        %p231 = pneg %p82
        %p232 = pneg %p106
        %p233 = pneg %p103
        %p234 = pneg %p127
        %p235 = pneg %p124
        %p236 = pneg %p153
        %p237 = pneg %p150
        %s238 = sand.u32 %s140, 1
        %s239 = scalar_lea.sflag [#allocation5], %s238
        %s240 = sand.u32 %s140, 1
        %s241 = smul.addr %s240, 12
        %s242 = scalar_lea.vmem [#allocation6], %s241
        %v243 = vld [vmem:[%s215] sm:$0xff]
        %v244 = vld [vmem:[%s215 + $0x8] sm:$0xff]
        %v245 = vld [vmem:[%s215 + $0x10] sm:$0xf]
        %248 = vst [vmem:[#allocation1] ss:$2 sm:$0xff] %v243
        %s249 = scalar_lea.vmem [#allocation1], 16
        %250 = vst [vmem:[%s249] ss:$2 sm:$0xff] %v244
        %v251 = vld.sshfl [vmem:[#allocation1] sm:$0xff pattern:$0x75316420]
        %v252 = vld.sshfl [vmem:[#allocation1 + $0x8] sm:$0xff pattern:$0x75316420]
        %v253 = vld.sshfl [vmem:[#allocation1 + $0x10] sm:$0xff pattern:$0x75316420]
        %v254 = vld.sshfl [vmem:[#allocation1 + $0x18] sm:$0xff pattern:$0x75316420]
        %255 = vrot.lane.b32.xlu0 %v251, 53
        %v256 = vpop.permute.xlu0 %255
        %257 = vrot.lane.b32.xlu0 %v252, 53
        %v258 = vpop.permute.xlu0 %257
        %259 = vrot.lane.b32.xlu0 %v253, 53
        %v260 = vpop.permute.xlu0 %259
        %261 = vrot.lane.b32.xlu0 %v254, 53
        %v262 = vpop.permute.xlu0 %261
        %vm263 = vcmask 433152
        %v264 = vsel %vm263, %v256, %v258
        %v265 = vsel %vm263, %v258, %v260
        %v266 = vsel %vm263, %v260, %v262
        %270 = vst [vmem:[#allocation2] sm:$0xf] %v264
        %271 = vst [vmem:[#allocation2 + $0x8] sm:$0xf] %v265
        %272 = vst [vmem:[#allocation2 + $0x10] sm:$0xf] %v266
        %s273 = scalar_lea.vmem [#allocation1], 1
        %274 = vst [vmem:[%s273] ss:$2 sm:$0xff] %v243
        %s275 = scalar_lea.vmem [#allocation1], 17
        %276 = vst [vmem:[%s275] ss:$2 sm:$0xff] %v244
        %v277 = vld.sshfl [vmem:[#allocation1] sm:$0xff pattern:$0x75316420]
        %v278 = vld.sshfl [vmem:[#allocation1 + $0x8] sm:$0xff pattern:$0x75316420]
        %v279 = vld.sshfl [vmem:[#allocation1 + $0x10] sm:$0xff pattern:$0x75316420]
        %v280 = vld.sshfl [vmem:[#allocation1 + $0x18] sm:$0xff pattern:$0x75316420]
        %281 = vrot.lane.b32.xlu0 %v277, 52
        %v282 = vpop.permute.xlu0 %281
        %283 = vrot.lane.b32.xlu0 %v278, 52
        %v284 = vpop.permute.xlu0 %283
        %285 = vrot.lane.b32.xlu0 %v279, 52
        %v286 = vpop.permute.xlu0 %285
        %287 = vrot.lane.b32.xlu0 %v280, 52
        %v288 = vpop.permute.xlu0 %287
        %vm289 = vcmask 424960
        %v290 = vsel %vm289, %v282, %v284
        %v291 = vsel %vm289, %v284, %v286
        %v292 = vsel %vm289, %v286, %v288
        %296 = vst [vmem:[#allocation2] sm:$0xf0] %v290
        %297 = vst [vmem:[#allocation2 + $0x8] sm:$0xf0] %v291
        %298 = vst [vmem:[#allocation2 + $0x10] sm:$0xf0] %v292
        %299 = vst [vmem:[#allocation1] ss:$2 sm:$0xff] %v243
        %s300 = scalar_lea.vmem [#allocation1], 16
        %301 = vst [vmem:[%s300] ss:$2 sm:$0xff] %v244
        %v302 = vld.sshfl [vmem:[#allocation1] sm:$0xff pattern:$0x75316420]
        %v303 = vld.sshfl [vmem:[#allocation1 + $0x8] sm:$0xff pattern:$0x75316420]
        %v304 = vld.sshfl [vmem:[#allocation1 + $0x10] sm:$0xff pattern:$0x75316420]
        %v305 = vld.sshfl [vmem:[#allocation1 + $0x18] sm:$0xff pattern:$0x75316420]
        %306 = vrot.lane.b32.xlu0 %v302, 51
        %v307 = vpop.permute.xlu0 %306
        %308 = vrot.lane.b32.xlu0 %v303, 51
        %v309 = vpop.permute.xlu0 %308
        %310 = vrot.lane.b32.xlu0 %v304, 51
        %v311 = vpop.permute.xlu0 %310
        %312 = vrot.lane.b32.xlu0 %v305, 51
        %v313 = vpop.permute.xlu0 %312
        %vm314 = vcmask 416768
        %v315 = vsel %vm314, %v307, %v309
        %v316 = vsel %vm314, %v309, %v311
        %v317 = vsel %vm314, %v311, %v313
        %321 = vst [vmem:[#allocation2 + $0x18] sm:$0xf] %v315
        %322 = vst [vmem:[#allocation2 + $0x20] sm:$0xf] %v316
        %323 = vst [vmem:[#allocation2 + $0x28] sm:$0xf] %v317
        %s324 = scalar_lea.vmem [#allocation1], 1
        %325 = vst [vmem:[%s324] ss:$2 sm:$0xff] %v243
        %s326 = scalar_lea.vmem [#allocation1], 17
        %327 = vst [vmem:[%s326] ss:$2 sm:$0xff] %v244
        %v328 = vld.sshfl [vmem:[#allocation1] sm:$0xff pattern:$0x75316420]
        %v329 = vld.sshfl [vmem:[#allocation1 + $0x8] sm:$0xff pattern:$0x75316420]
        %v330 = vld.sshfl [vmem:[#allocation1 + $0x10] sm:$0xff pattern:$0x75316420]
        %v331 = vld.sshfl [vmem:[#allocation1 + $0x18] sm:$0xff pattern:$0x75316420]
        %332 = vrot.lane.b32.xlu0 %v328, 29
        %v333 = vpop.permute.xlu0 %332
        %334 = vrot.lane.b32.xlu0 %v329, 29
        %v335 = vpop.permute.xlu0 %334
        %336 = vrot.lane.b32.xlu0 %v330, 29
        %v337 = vpop.permute.xlu0 %336
        %338 = vrot.lane.b32.xlu0 %v331, 29
        %v339 = vpop.permute.xlu0 %338
        %vm340 = vcmask 236544
        %v341 = vsel %vm340, %v333, %v335
        %v342 = vsel %vm340, %v335, %v337
        %v343 = vsel %vm340, %v337, %v339
        %347 = vst [vmem:[#allocation2 + $0x18] sm:$0xf0] %v341
        %348 = vst [vmem:[#allocation2 + $0x20] sm:$0xf0] %v342
        %349 = vst [vmem:[#allocation2 + $0x28] sm:$0xf0] %v343
        %350 = vst [vmem:[#allocation1] ss:$2 sm:$0xff] %v243
        %s351 = scalar_lea.vmem [#allocation1], 16
        %352 = vst [vmem:[%s351] ss:$2 sm:$0xff] %v244
        %v353 = vld.sshfl [vmem:[#allocation1] sm:$0xff pattern:$0x75316420]
        %v354 = vld.sshfl [vmem:[#allocation1 + $0x8] sm:$0xff pattern:$0x75316420]
        %v355 = vld.sshfl [vmem:[#allocation1 + $0x10] sm:$0xff pattern:$0x75316420]
        %v356 = vld.sshfl [vmem:[#allocation1 + $0x18] sm:$0xff pattern:$0x75316420]
        %357 = vrot.lane.b32.xlu0 %v353, 28
        %v358 = vpop.permute.xlu0 %357
        %359 = vrot.lane.b32.xlu0 %v354, 28
        %v360 = vpop.permute.xlu0 %359
        %361 = vrot.lane.b32.xlu0 %v355, 28
        %v362 = vpop.permute.xlu0 %361
        %363 = vrot.lane.b32.xlu0 %v356, 28
        %v364 = vpop.permute.xlu0 %363
        %vm365 = vcmask 228352
        %v366 = vsel %vm365, %v358, %v360
        %v367 = vsel %vm365, %v360, %v362
        %v368 = vsel %vm365, %v362, %v364
        %372 = vst [vmem:[#allocation2 + $0x30] sm:$0xf] %v366
        %373 = vst [vmem:[#allocation2 + $0x38] sm:$0xf] %v367
        %374 = vst [vmem:[#allocation2 + $0x40] sm:$0xf] %v368
        %s375 = scalar_lea.vmem [#allocation1], 1
        %376 = vst [vmem:[%s375] ss:$2 sm:$0xff] %v243
        %s377 = scalar_lea.vmem [#allocation1], 17
        %378 = vst [vmem:[%s377] ss:$2 sm:$0xff] %v244
        %v379 = vld.sshfl [vmem:[#allocation1] sm:$0xff pattern:$0x75316420]
        %v380 = vld.sshfl [vmem:[#allocation1 + $0x8] sm:$0xff pattern:$0x75316420]
        %v381 = vld.sshfl [vmem:[#allocation1 + $0x10] sm:$0xff pattern:$0x75316420]
        %v382 = vld.sshfl [vmem:[#allocation1 + $0x18] sm:$0xff pattern:$0x75316420]
        %383 = vrot.lane.b32.xlu0 %v379, 27
        %v384 = vpop.permute.xlu0 %383
        %385 = vrot.lane.b32.xlu0 %v380, 27
        %v386 = vpop.permute.xlu0 %385
        %387 = vrot.lane.b32.xlu0 %v381, 27
        %v388 = vpop.permute.xlu0 %387
        %389 = vrot.lane.b32.xlu0 %v382, 27
        %v390 = vpop.permute.xlu0 %389
        %vm391 = vcmask 220160
        %v392 = vsel %vm391, %v384, %v386
        %v393 = vsel %vm391, %v386, %v388
        %v394 = vsel %vm391, %v388, %v390
        %398 = vst [vmem:[#allocation2 + $0x30] sm:$0xf0] %v392
        %399 = vst [vmem:[#allocation2 + $0x38] sm:$0xf0] %v393
        %400 = vst [vmem:[#allocation2 + $0x40] sm:$0xf0] %v394
        %401 = vst [vmem:[#allocation1] ss:$2 sm:$0xff] %v243
        %s402 = scalar_lea.vmem [#allocation1], 16
        %403 = vst [vmem:[%s402] ss:$2 sm:$0xff] %v244
        %v404 = vld.sshfl [vmem:[#allocation1] sm:$0xff pattern:$0x75316420]
        %v405 = vld.sshfl [vmem:[#allocation1 + $0x8] sm:$0xff pattern:$0x75316420]
        %v406 = vld.sshfl [vmem:[#allocation1 + $0x10] sm:$0xff pattern:$0x75316420]
        %v407 = vld.sshfl [vmem:[#allocation1 + $0x18] sm:$0xff pattern:$0x75316420]
        %408 = vrot.lane.b32.xlu0 %v404, 5
        %v409 = vpop.permute.xlu0 %408
        %410 = vrot.lane.b32.xlu0 %v405, 5
        %v411 = vpop.permute.xlu0 %410
        %412 = vrot.lane.b32.xlu0 %v406, 5
        %v413 = vpop.permute.xlu0 %412
        %414 = vrot.lane.b32.xlu0 %v407, 5
        %v415 = vpop.permute.xlu0 %414
        %vm416 = vcmask 39936
        %v417 = vsel %vm416, %v409, %v411
        %v418 = vsel %vm416, %v411, %v413
        %v419 = vsel %vm416, %v413, %v415
        %423 = vst [vmem:[#allocation2 + $0x48] sm:$0xf] %v417
        %424 = vst [vmem:[#allocation2 + $0x50] sm:$0xf] %v418
        %425 = vst [vmem:[#allocation2 + $0x58] sm:$0xf] %v419
        %s426 = scalar_lea.vmem [#allocation1], 1
        %427 = vst [vmem:[%s426] ss:$2 sm:$0xff] %v243
        %s428 = scalar_lea.vmem [#allocation1], 17
        %429 = vst [vmem:[%s428] ss:$2 sm:$0xff] %v244
        %v430 = vld.sshfl [vmem:[#allocation1] sm:$0xff pattern:$0x75316420]
        %v431 = vld.sshfl [vmem:[#allocation1 + $0x8] sm:$0xff pattern:$0x75316420]
        %v432 = vld.sshfl [vmem:[#allocation1 + $0x10] sm:$0xff pattern:$0x75316420]
        %v433 = vld.sshfl [vmem:[#allocation1 + $0x18] sm:$0xff pattern:$0x75316420]
        %434 = vrot.lane.b32.xlu0 %v430, 4
        %v435 = vpop.permute.xlu0 %434
        %436 = vrot.lane.b32.xlu0 %v431, 4
        %v437 = vpop.permute.xlu0 %436
        %438 = vrot.lane.b32.xlu0 %v432, 4
        %v439 = vpop.permute.xlu0 %438
        %440 = vrot.lane.b32.xlu0 %v433, 4
        %v441 = vpop.permute.xlu0 %440
        %vm442 = vcmask 31744
        %v443 = vsel %vm442, %v435, %v437
        %v444 = vsel %vm442, %v437, %v439
        %v445 = vsel %vm442, %v439, %v441
        %449 = vst [vmem:[#allocation2 + $0x48] sm:$0xf0] %v443
        %450 = vst [vmem:[#allocation2 + $0x50] sm:$0xf0] %v444
        %451 = vst [vmem:[#allocation2 + $0x58] sm:$0xf0] %v445
        %452 = vst [vmem:[#allocation1] ss:$2 sm:$0xff] %v243
        %s453 = scalar_lea.vmem [#allocation1], 16
        %454 = vst [vmem:[%s453] ss:$2 sm:$0xff] %v244
        %v455 = vld.sshfl [vmem:[#allocation1] sm:$0xff pattern:$0x75316420]
        %v456 = vld.sshfl [vmem:[#allocation1 + $0x8] sm:$0xff pattern:$0x75316420]
        %v457 = vld.sshfl [vmem:[#allocation1 + $0x10] sm:$0xff pattern:$0x75316420]
        %v458 = vld.sshfl [vmem:[#allocation1 + $0x18] sm:$0xff pattern:$0x75316420]
        %459 = vrot.lane.b32.xlu0 %v455, 3
        %v460 = vpop.permute.xlu0 %459
        %461 = vrot.lane.b32.xlu0 %v456, 3
        %v462 = vpop.permute.xlu0 %461
        %463 = vrot.lane.b32.xlu0 %v457, 3
        %v464 = vpop.permute.xlu0 %463
        %465 = vrot.lane.b32.xlu0 %v458, 3
        %v466 = vpop.permute.xlu0 %465
        %vm467 = vcmask 23552
        %v468 = vsel %vm467, %v460, %v462
        %v469 = vsel %vm467, %v462, %v464
        %v470 = vsel %vm467, %v464, %v466
        %474 = vst [vmem:[#allocation2 + $0x60] sm:$0xf] %v468
        %475 = vst [vmem:[#allocation2 + $0x68] sm:$0xf] %v469
        %476 = vst [vmem:[#allocation2 + $0x70] sm:$0xf] %v470
        %s477 = scalar_lea.vmem [#allocation1], 1
        %478 = vst [vmem:[%s477] ss:$2 sm:$0xff] %v243
        %s479 = scalar_lea.vmem [#allocation1], 17
        %480 = vst [vmem:[%s479] ss:$2 sm:$0xff] %v244
        %v481 = vld.sshfl [vmem:[#allocation1] sm:$0xff pattern:$0x75316420]
        %v482 = vld.sshfl [vmem:[#allocation1 + $0x8] sm:$0xff pattern:$0x75316420]
        %v483 = vld.sshfl [vmem:[#allocation1 + $0x10] sm:$0xff pattern:$0x75316420]
        %v484 = vld.sshfl [vmem:[#allocation1 + $0x18] sm:$0xff pattern:$0x75316420]
        %485 = vrot.lane.b32.xlu0 %v481, 78
        %v486 = vpop.permute.xlu0 %485
        %487 = vrot.lane.b32.xlu0 %v482, 78
        %v488 = vpop.permute.xlu0 %487
        %489 = vrot.lane.b32.xlu0 %v483, 78
        %v490 = vpop.permute.xlu0 %489
        %491 = vrot.lane.b32.xlu0 %v484, 78
        %v492 = vpop.permute.xlu0 %491
        %vm493 = vcmask 637952
        %v494 = vsel %vm493, %v486, %v488
        %v495 = vsel %vm493, %v488, %v490
        %v496 = vsel %vm493, %v490, %v492
        %500 = vst [vmem:[#allocation2 + $0x60] sm:$0xf0] %v494
        %501 = vst [vmem:[#allocation2 + $0x68] sm:$0xf0] %v495
        %502 = vst [vmem:[#allocation2 + $0x70] sm:$0xf0] %v496
        %503 = vst [vmem:[#allocation1] ss:$2 sm:$0xff] %v243
        %s504 = scalar_lea.vmem [#allocation1], 16
        %505 = vst [vmem:[%s504] ss:$2 sm:$0xff] %v244
        %v506 = vld.sshfl [vmem:[#allocation1] sm:$0xff pattern:$0x75316420]
        %v507 = vld.sshfl [vmem:[#allocation1 + $0x8] sm:$0xff pattern:$0x75316420]
        %v508 = vld.sshfl [vmem:[#allocation1 + $0x10] sm:$0xff pattern:$0x75316420]
        %v509 = vld.sshfl [vmem:[#allocation1 + $0x18] sm:$0xff pattern:$0x75316420]
        %510 = vrot.lane.b32.xlu0 %v506, 76
        %v511 = vpop.permute.xlu0 %510
        %512 = vrot.lane.b32.xlu0 %v507, 76
        %v513 = vpop.permute.xlu0 %512
        %514 = vrot.lane.b32.xlu0 %v508, 76
        %v515 = vpop.permute.xlu0 %514
        %516 = vrot.lane.b32.xlu0 %v509, 76
        %v517 = vpop.permute.xlu0 %516
        %vm518 = vcmask 621568
        %v519 = vsel %vm518, %v511, %v513
        %v520 = vsel %vm518, %v513, %v515
        %v521 = vsel %vm518, %v515, %v517
        %525 = vst [vmem:[#allocation2 + $0x78] sm:$0xf] %v519
        %526 = vst [vmem:[#allocation2 + $0x80] sm:$0xf] %v520
        %527 = vst [vmem:[#allocation2 + $0x88] sm:$0xf] %v521
        %s528 = scalar_lea.vmem [#allocation1], 1
        %529 = vst [vmem:[%s528] ss:$2 sm:$0xff] %v243
        %s530 = scalar_lea.vmem [#allocation1], 17
        %531 = vst [vmem:[%s530] ss:$2 sm:$0xff] %v244
        %v532 = vld.sshfl [vmem:[#allocation1] sm:$0xff pattern:$0x75316420]
        %v533 = vld.sshfl [vmem:[#allocation1 + $0x8] sm:$0xff pattern:$0x75316420]
        %v534 = vld.sshfl [vmem:[#allocation1 + $0x10] sm:$0xff pattern:$0x75316420]
        %v535 = vld.sshfl [vmem:[#allocation1 + $0x18] sm:$0xff pattern:$0x75316420]
        %536 = vrot.lane.b32.xlu0 %v532, 74
        %v537 = vpop.permute.xlu0 %536
        %538 = vrot.lane.b32.xlu0 %v533, 74
        %v539 = vpop.permute.xlu0 %538
        %540 = vrot.lane.b32.xlu0 %v534, 74
        %v541 = vpop.permute.xlu0 %540
        %542 = vrot.lane.b32.xlu0 %v535, 74
        %v543 = vpop.permute.xlu0 %542
        %vm544 = vcmask 605184
        %v545 = vsel %vm544, %v537, %v539
        %v546 = vsel %vm544, %v539, %v541
        %v547 = vsel %vm544, %v541, %v543
        %551 = vst [vmem:[#allocation2 + $0x78] sm:$0xf0] %v545
        %552 = vst [vmem:[#allocation2 + $0x80] sm:$0xf0] %v546
        %553 = vst [vmem:[#allocation2 + $0x88] sm:$0xf0] %v547
        %554 = vst [vmem:[#allocation1] ss:$2 sm:$0xff] %v243
        %s555 = scalar_lea.vmem [#allocation1], 16
        %556 = vst [vmem:[%s555] ss:$2 sm:$0xff] %v244
        %v557 = vld.sshfl [vmem:[#allocation1] sm:$0xff pattern:$0x75316420]
        %v558 = vld.sshfl [vmem:[#allocation1 + $0x8] sm:$0xff pattern:$0x75316420]
        %v559 = vld.sshfl [vmem:[#allocation1 + $0x10] sm:$0xff pattern:$0x75316420]
        %v560 = vld.sshfl [vmem:[#allocation1 + $0x18] sm:$0xff pattern:$0x75316420]
        %561 = vrot.lane.b32.xlu0 %v557, 30
        %v562 = vpop.permute.xlu0 %561
        %563 = vrot.lane.b32.xlu0 %v558, 30
        %v564 = vpop.permute.xlu0 %563
        %565 = vrot.lane.b32.xlu0 %v559, 30
        %v566 = vpop.permute.xlu0 %565
        %567 = vrot.lane.b32.xlu0 %v560, 30
        %v568 = vpop.permute.xlu0 %567
        %vm569 = vcmask 244736
        %v570 = vsel %vm569, %v562, %v564
        %v571 = vsel %vm569, %v564, %v566
        %v572 = vsel %vm569, %v566, %v568
        %576 = vst [vmem:[#allocation2 + $0x90] sm:$0xf] %v570
        %577 = vst [vmem:[#allocation2 + $0x98] sm:$0xf] %v571
        %578 = vst [vmem:[#allocation2 + $0xa0] sm:$0xf] %v572
        %s579 = scalar_lea.vmem [#allocation1], 1
        %580 = vst [vmem:[%s579] ss:$2 sm:$0xff] %v243
        %s581 = scalar_lea.vmem [#allocation1], 17
        %582 = vst [vmem:[%s581] ss:$2 sm:$0xff] %v244
        %v583 = vld.sshfl [vmem:[#allocation1] sm:$0xff pattern:$0x75316420]
        %v584 = vld.sshfl [vmem:[#allocation1 + $0x8] sm:$0xff pattern:$0x75316420]
        %v585 = vld.sshfl [vmem:[#allocation1 + $0x10] sm:$0xff pattern:$0x75316420]
        %v586 = vld.sshfl [vmem:[#allocation1 + $0x18] sm:$0xff pattern:$0x75316420]
        %587 = vrot.lane.b32.xlu0 %v583, 28
        %v588 = vpop.permute.xlu0 %587
        %589 = vrot.lane.b32.xlu0 %v584, 28
        %v590 = vpop.permute.xlu0 %589
        %591 = vrot.lane.b32.xlu0 %v585, 28
        %v592 = vpop.permute.xlu0 %591
        %593 = vrot.lane.b32.xlu0 %v586, 28
        %v594 = vpop.permute.xlu0 %593
        %v595 = vsel %vm365, %v588, %v590
        %v596 = vsel %vm365, %v590, %v592
        %v597 = vsel %vm365, %v592, %v594
        %601 = vst [vmem:[#allocation2 + $0x90] sm:$0xf0] %v595
        %602 = vst [vmem:[#allocation2 + $0x98] sm:$0xf0] %v596
        %603 = vst [vmem:[#allocation2 + $0xa0] sm:$0xf0] %v597
        %604 = vst [vmem:[#allocation1] ss:$2 sm:$0xff] %v243
        %s605 = scalar_lea.vmem [#allocation1], 16
        %606 = vst [vmem:[%s605] ss:$2 sm:$0xff] %v244
        %v607 = vld.sshfl [vmem:[#allocation1] sm:$0xff pattern:$0x75316420]
        %v608 = vld.sshfl [vmem:[#allocation1 + $0x8] sm:$0xff pattern:$0x75316420]
        %v609 = vld.sshfl [vmem:[#allocation1 + $0x10] sm:$0xff pattern:$0x75316420]
        %v610 = vld.sshfl [vmem:[#allocation1 + $0x18] sm:$0xff pattern:$0x75316420]
        %611 = vrot.lane.b32.xlu0 %v607, 26
        %v612 = vpop.permute.xlu0 %611
        %613 = vrot.lane.b32.xlu0 %v608, 26
        %v614 = vpop.permute.xlu0 %613
        %615 = vrot.lane.b32.xlu0 %v609, 26
        %v616 = vpop.permute.xlu0 %615
        %617 = vrot.lane.b32.xlu0 %v610, 26
        %v618 = vpop.permute.xlu0 %617
        %vm619 = vcmask 211968
        %v620 = vsel %vm619, %v612, %v614
        %v621 = vsel %vm619, %v614, %v616
        %v622 = vsel %vm619, %v616, %v618
        %626 = vst [vmem:[#allocation2 + $0xa8] sm:$0xf] %v620
        %627 = vst [vmem:[#allocation2 + $0xb0] sm:$0xf] %v621
        %628 = vst [vmem:[#allocation2 + $0xb8] sm:$0xf] %v622
        %s630 = scalar_lea.vmem [#allocation1], 1
        %631 = vst [vmem:[%s630] ss:$2 sm:$0xff] %v243
        %s632 = scalar_lea.vmem [#allocation1], 17
        %633 = vst [vmem:[%s632] ss:$2 sm:$0xff] %v244
        %s634 = scalar_lea.vmem [#allocation1], 33
        %635 = vst [vmem:[%s634] ss:$2 sm:$0xff] %v245
        %v636 = vld.sshfl [vmem:[#allocation1 + $0x8] sm:$0xff pattern:$0x75316420]
        %v637 = vld.sshfl [vmem:[#allocation1 + $0x10] sm:$0xff pattern:$0x75316420]
        %v638 = vld.sshfl [vmem:[#allocation1 + $0x18] sm:$0xff pattern:$0x75316420]
        %v639 = vld.sshfl [vmem:[#allocation1 + $0x20] sm:$0xff pattern:$0x75316420]
        %640 = vrot.lane.b32.xlu0 %v636, 110
        %v641 = vpop.permute.xlu0 %640
        %642 = vrot.lane.b32.xlu0 %v637, 110
        %v643 = vpop.permute.xlu0 %642
        %644 = vrot.lane.b32.xlu0 %v638, 110
        %v645 = vpop.permute.xlu0 %644
        %646 = vrot.lane.b32.xlu0 %v639, 110
        %v647 = vpop.permute.xlu0 %646
        %vm648 = vcmask 900096
        %v649 = vsel %vm648, %v641, %v643
        %v650 = vsel %vm648, %v643, %v645
        %v651 = vsel %vm648, %v645, %v647
        %655 = vst [vmem:[#allocation2 + $0xa8] sm:$0xf0] %v649
        %656 = vst [vmem:[#allocation2 + $0xb0] sm:$0xf0] %v650
        %657 = vst [vmem:[#allocation2 + $0xb8] sm:$0xf0] %v651
        %658 = vst [vmem:[#allocation1] ss:$2 sm:$0xff] %v243
        %s659 = scalar_lea.vmem [#allocation1], 16
        %660 = vst [vmem:[%s659] ss:$2 sm:$0xff] %v244
        %s661 = scalar_lea.vmem [#allocation1], 32
        %662 = vst [vmem:[%s661] ss:$2 sm:$0xff] %v245
        %v663 = vld.sshfl [vmem:[#allocation1 + $0x8] sm:$0xff pattern:$0x75316420]
        %v664 = vld.sshfl [vmem:[#allocation1 + $0x10] sm:$0xff pattern:$0x75316420]
        %v665 = vld.sshfl [vmem:[#allocation1 + $0x18] sm:$0xff pattern:$0x75316420]
        %v666 = vld.sshfl [vmem:[#allocation1 + $0x20] sm:$0xff pattern:$0x75316420]
        %667 = vrot.lane.b32.xlu0 %v663, 108
        %v668 = vpop.permute.xlu0 %667
        %669 = vrot.lane.b32.xlu0 %v664, 108
        %v670 = vpop.permute.xlu0 %669
        %671 = vrot.lane.b32.xlu0 %v665, 108
        %v672 = vpop.permute.xlu0 %671
        %673 = vrot.lane.b32.xlu0 %v666, 108
        %v674 = vpop.permute.xlu0 %673
        %vm675 = vcmask 883712
        %v676 = vsel %vm675, %v668, %v670
        %v677 = vsel %vm675, %v670, %v672
        %v678 = vsel %vm675, %v672, %v674
        %682 = vst [vmem:[#allocation2 + $0xc0] sm:$0xf] %v676
        %683 = vst [vmem:[#allocation2 + $0xc8] sm:$0xf] %v677
        %684 = vst [vmem:[#allocation2 + $0xd0] sm:$0xf] %v678
        %s685 = scalar_lea.vmem [#allocation1], 1
        %686 = vst [vmem:[%s685] ss:$2 sm:$0xff] %v243
        %s687 = scalar_lea.vmem [#allocation1], 17
        %688 = vst [vmem:[%s687] ss:$2 sm:$0xff] %v244
        %s689 = scalar_lea.vmem [#allocation1], 33
        %690 = vst [vmem:[%s689] ss:$2 sm:$0xff] %v245
        %v691 = vld.sshfl [vmem:[#allocation1 + $0x8] sm:$0xff pattern:$0x75316420]
        %v692 = vld.sshfl [vmem:[#allocation1 + $0x10] sm:$0xff pattern:$0x75316420]
        %v693 = vld.sshfl [vmem:[#allocation1 + $0x18] sm:$0xff pattern:$0x75316420]
        %v694 = vld.sshfl [vmem:[#allocation1 + $0x20] sm:$0xff pattern:$0x75316420]
        %695 = vrot.lane.b32.xlu0 %v691, 106
        %v696 = vpop.permute.xlu0 %695
        %697 = vrot.lane.b32.xlu0 %v692, 106
        %v698 = vpop.permute.xlu0 %697
        %699 = vrot.lane.b32.xlu0 %v693, 106
        %v700 = vpop.permute.xlu0 %699
        %701 = vrot.lane.b32.xlu0 %v694, 106
        %v702 = vpop.permute.xlu0 %701
        %vm703 = vcmask 867328
        %v704 = vsel %vm703, %v696, %v698
        %v705 = vsel %vm703, %v698, %v700
        %v706 = vsel %vm703, %v700, %v702
        %710 = vst [vmem:[#allocation2 + $0xc0] sm:$0xf0] %v704
        %711 = vst [vmem:[#allocation2 + $0xc8] sm:$0xf0] %v705
        %712 = vst [vmem:[#allocation2 + $0xd0] sm:$0xf0] %v706
        %713 = vst [vmem:[#allocation1] ss:$2 sm:$0xff] %v243
        %s714 = scalar_lea.vmem [#allocation1], 16
        %715 = vst [vmem:[%s714] ss:$2 sm:$0xff] %v244
        %v716 = vld.sshfl [vmem:[#allocation1] sm:$0xff pattern:$0x75316420]
        %v717 = vld.sshfl [vmem:[#allocation1 + $0x8] sm:$0xff pattern:$0x75316420]
        %v718 = vld.sshfl [vmem:[#allocation1 + $0x10] sm:$0xff pattern:$0x75316420]
        %722 = vst [vmem:[#allocation2 + $0xd8] sm:$0xf] %v716
        %723 = vst [vmem:[#allocation2 + $0xe0] sm:$0xf] %v717
        %724 = vst [vmem:[#allocation2 + $0xe8] sm:$0xf] %v718
        %s725 = scalar_lea.vmem [#allocation1], 1
        %726 = vst [vmem:[%s725] ss:$2 sm:$0xff] %v243
        %s727 = scalar_lea.vmem [#allocation1], 17
        %728 = vst [vmem:[%s727] ss:$2 sm:$0xff] %v244
        %v729 = vld.sshfl [vmem:[#allocation1] sm:$0xff pattern:$0x75316420]
        %v730 = vld.sshfl [vmem:[#allocation1 + $0x8] sm:$0xff pattern:$0x75316420]
        %v731 = vld.sshfl [vmem:[#allocation1 + $0x10] sm:$0xff pattern:$0x75316420]
        %v732 = vld.sshfl [vmem:[#allocation1 + $0x18] sm:$0xff pattern:$0x75316420]
        %733 = vrot.lane.b32.xlu0 %v729, 124
        %v734 = vpop.permute.xlu0 %733
        %735 = vrot.lane.b32.xlu0 %v730, 124
        %v736 = vpop.permute.xlu0 %735
        %737 = vrot.lane.b32.xlu0 %v731, 124
        %v738 = vpop.permute.xlu0 %737
        %739 = vrot.lane.b32.xlu0 %v732, 124
        %v740 = vpop.permute.xlu0 %739
        %vm741 = vcmask 1014784
        %v742 = vsel %vm741, %v734, %v736
        %v743 = vsel %vm741, %v736, %v738
        %v744 = vsel %vm741, %v738, %v740
        %748 = vst [vmem:[#allocation2 + $0xd8] sm:$0xf0] %v742
        %749 = vst [vmem:[#allocation2 + $0xe0] sm:$0xf0] %v743
        %750 = vst [vmem:[#allocation2 + $0xe8] sm:$0xf0] %v744
        %751 = vst [vmem:[#allocation1] ss:$2 sm:$0xff] %v243
        %s752 = scalar_lea.vmem [#allocation1], 16
        %753 = vst [vmem:[%s752] ss:$2 sm:$0xff] %v244
        %v754 = vld.sshfl [vmem:[#allocation1] sm:$0xff pattern:$0x75316420]
        %v755 = vld.sshfl [vmem:[#allocation1 + $0x8] sm:$0xff pattern:$0x75316420]
        %v756 = vld.sshfl [vmem:[#allocation1 + $0x10] sm:$0xff pattern:$0x75316420]
        %v757 = vld.sshfl [vmem:[#allocation1 + $0x18] sm:$0xff pattern:$0x75316420]
        %758 = vrot.lane.b32.xlu0 %v754, 120
        %v759 = vpop.permute.xlu0 %758
        %760 = vrot.lane.b32.xlu0 %v755, 120
        %v761 = vpop.permute.xlu0 %760
        %762 = vrot.lane.b32.xlu0 %v756, 120
        %v763 = vpop.permute.xlu0 %762
        %764 = vrot.lane.b32.xlu0 %v757, 120
        %v765 = vpop.permute.xlu0 %764
        %vm766 = vcmask 982016
        %v767 = vsel %vm766, %v759, %v761
        %v768 = vsel %vm766, %v761, %v763
        %v769 = vsel %vm766, %v763, %v765
        %773 = vst [vmem:[#allocation2 + $0xf0] sm:$0xf] %v767
        %774 = vst [vmem:[#allocation2 + $0xf8] sm:$0xf] %v768
        %775 = vst [vmem:[#allocation2 + $0x100] sm:$0xf] %v769
        %s776 = scalar_lea.vmem [#allocation1], 1
        %777 = vst [vmem:[%s776] ss:$2 sm:$0xff] %v243
        %s778 = scalar_lea.vmem [#allocation1], 17
        %779 = vst [vmem:[%s778] ss:$2 sm:$0xff] %v244
        %v780 = vld.sshfl [vmem:[#allocation1] sm:$0xff pattern:$0x75316420]
        %v781 = vld.sshfl [vmem:[#allocation1 + $0x8] sm:$0xff pattern:$0x75316420]
        %v782 = vld.sshfl [vmem:[#allocation1 + $0x10] sm:$0xff pattern:$0x75316420]
        %v783 = vld.sshfl [vmem:[#allocation1 + $0x18] sm:$0xff pattern:$0x75316420]
        %784 = vrot.lane.b32.xlu0 %v780, 32
        %v785 = vpop.permute.xlu0 %784
        %786 = vrot.lane.b32.xlu0 %v781, 32
        %v787 = vpop.permute.xlu0 %786
        %788 = vrot.lane.b32.xlu0 %v782, 32
        %v789 = vpop.permute.xlu0 %788
        %790 = vrot.lane.b32.xlu0 %v783, 32
        %v791 = vpop.permute.xlu0 %790
        %vm792 = vcmask 261120
        %v793 = vsel %vm792, %v785, %v787
        %v794 = vsel %vm792, %v787, %v789
        %v795 = vsel %vm792, %v789, %v791
        %799 = vst [vmem:[#allocation2 + $0xf0] sm:$0xf0] %v793
        %800 = vst [vmem:[#allocation2 + $0xf8] sm:$0xf0] %v794
        %801 = vst [vmem:[#allocation2 + $0x100] sm:$0xf0] %v795
        %802 = vst [vmem:[#allocation1] ss:$2 sm:$0xff] %v243
        %s803 = scalar_lea.vmem [#allocation1], 16
        %804 = vst [vmem:[%s803] ss:$2 sm:$0xff] %v244
        %v805 = vld.sshfl [vmem:[#allocation1] sm:$0xff pattern:$0x75316420]
        %v806 = vld.sshfl [vmem:[#allocation1 + $0x8] sm:$0xff pattern:$0x75316420]
        %v807 = vld.sshfl [vmem:[#allocation1 + $0x10] sm:$0xff pattern:$0x75316420]
        %v808 = vld.sshfl [vmem:[#allocation1 + $0x18] sm:$0xff pattern:$0x75316420]
        %809 = vrot.lane.b32.xlu0 %v805, 28
        %v810 = vpop.permute.xlu0 %809
        %811 = vrot.lane.b32.xlu0 %v806, 28
        %v812 = vpop.permute.xlu0 %811
        %813 = vrot.lane.b32.xlu0 %v807, 28
        %v814 = vpop.permute.xlu0 %813
        %815 = vrot.lane.b32.xlu0 %v808, 28
        %v816 = vpop.permute.xlu0 %815
        %v817 = vsel %vm365, %v810, %v812
        %v818 = vsel %vm365, %v812, %v814
        %v819 = vsel %vm365, %v814, %v816
        %823 = vst [vmem:[#allocation2 + $0x108] sm:$0xf] %v817
        %824 = vst [vmem:[#allocation2 + $0x110] sm:$0xf] %v818
        %825 = vst [vmem:[#allocation2 + $0x118] sm:$0xf] %v819
        %s826 = scalar_lea.vmem [#allocation1], 1
        %827 = vst [vmem:[%s826] ss:$2 sm:$0xff] %v243
        %s828 = scalar_lea.vmem [#allocation1], 17
        %829 = vst [vmem:[%s828] ss:$2 sm:$0xff] %v244
        %v830 = vld.sshfl [vmem:[#allocation1] sm:$0xff pattern:$0x75316420]
        %v831 = vld.sshfl [vmem:[#allocation1 + $0x8] sm:$0xff pattern:$0x75316420]
        %v832 = vld.sshfl [vmem:[#allocation1 + $0x10] sm:$0xff pattern:$0x75316420]
        %v833 = vld.sshfl [vmem:[#allocation1 + $0x18] sm:$0xff pattern:$0x75316420]
        %834 = vrot.lane.b32.xlu0 %v830, 24
        %v835 = vpop.permute.xlu0 %834
        %836 = vrot.lane.b32.xlu0 %v831, 24
        %v837 = vpop.permute.xlu0 %836
        %838 = vrot.lane.b32.xlu0 %v832, 24
        %v839 = vpop.permute.xlu0 %838
        %840 = vrot.lane.b32.xlu0 %v833, 24
        %v841 = vpop.permute.xlu0 %840
        %vm842 = vcmask 195584
        %v843 = vsel %vm842, %v835, %v837
        %v844 = vsel %vm842, %v837, %v839
        %v845 = vsel %vm842, %v839, %v841
        %849 = vst [vmem:[#allocation2 + $0x108] sm:$0xf0] %v843
        %850 = vst [vmem:[#allocation2 + $0x110] sm:$0xf0] %v844
        %851 = vst [vmem:[#allocation2 + $0x118] sm:$0xf0] %v845
        %852 = vst [vmem:[#allocation1] ss:$2 sm:$0xff] %v243
        %s853 = scalar_lea.vmem [#allocation1], 16
        %854 = vst [vmem:[%s853] ss:$2 sm:$0xff] %v244
        %s855 = scalar_lea.vmem [#allocation1], 32
        %856 = vst [vmem:[%s855] ss:$2 sm:$0xff] %v245
        %v857 = vld.sshfl [vmem:[#allocation1 + $0x8] sm:$0xff pattern:$0x75316420]
        %v858 = vld.sshfl [vmem:[#allocation1 + $0x10] sm:$0xff pattern:$0x75316420]
        %v859 = vld.sshfl [vmem:[#allocation1 + $0x18] sm:$0xff pattern:$0x75316420]
        %v860 = vld.sshfl [vmem:[#allocation1 + $0x20] sm:$0xff pattern:$0x75316420]
        %861 = vrot.lane.b32.xlu0 %v857, 64
        %v862 = vpop.permute.xlu0 %861
        %863 = vrot.lane.b32.xlu0 %v858, 64
        %v864 = vpop.permute.xlu0 %863
        %865 = vrot.lane.b32.xlu0 %v859, 64
        %v866 = vpop.permute.xlu0 %865
        %867 = vrot.lane.b32.xlu0 %v860, 64
        %v868 = vpop.permute.xlu0 %867
        %vm869 = vcmask 523264
        %v870 = vsel %vm869, %v862, %v864
        %v871 = vsel %vm869, %v864, %v866
        %v872 = vsel %vm869, %v866, %v868
        %876 = vst [vmem:[#allocation2 + $0x120] sm:$0xf] %v870
        %877 = vst [vmem:[#allocation2 + $0x128] sm:$0xf] %v871
        %878 = vst [vmem:[#allocation2 + $0x130] sm:$0xf] %v872
        %s879 = scalar_lea.vmem [#allocation1], 1
        %880 = vst [vmem:[%s879] ss:$2 sm:$0xff] %v243
        %s881 = scalar_lea.vmem [#allocation1], 17
        %882 = vst [vmem:[%s881] ss:$2 sm:$0xff] %v244
        %s883 = scalar_lea.vmem [#allocation1], 33
        %884 = vst [vmem:[%s883] ss:$2 sm:$0xff] %v245
        %v885 = vld.sshfl [vmem:[#allocation1 + $0x8] sm:$0xff pattern:$0x75316420]
        %v886 = vld.sshfl [vmem:[#allocation1 + $0x10] sm:$0xff pattern:$0x75316420]
        %v887 = vld.sshfl [vmem:[#allocation1 + $0x18] sm:$0xff pattern:$0x75316420]
        %v888 = vld.sshfl [vmem:[#allocation1 + $0x20] sm:$0xff pattern:$0x75316420]
        %889 = vrot.lane.b32.xlu0 %v885, 60
        %v890 = vpop.permute.xlu0 %889
        %891 = vrot.lane.b32.xlu0 %v886, 60
        %v892 = vpop.permute.xlu0 %891
        %893 = vrot.lane.b32.xlu0 %v887, 60
        %v894 = vpop.permute.xlu0 %893
        %895 = vrot.lane.b32.xlu0 %v888, 60
        %v896 = vpop.permute.xlu0 %895
        %vm897 = vcmask 490496
        %v898 = vsel %vm897, %v890, %v892
        %v899 = vsel %vm897, %v892, %v894
        %v900 = vsel %vm897, %v894, %v896
        %904 = vst [vmem:[#allocation2 + $0x120] sm:$0xf0] %v898
        %905 = vst [vmem:[#allocation2 + $0x128] sm:$0xf0] %v899
        %906 = vst [vmem:[#allocation2 + $0x130] sm:$0xf0] %v900
        %907 = vst [vmem:[#allocation1] ss:$2 sm:$0xff] %v243
        %s908 = scalar_lea.vmem [#allocation1], 16
        %909 = vst [vmem:[%s908] ss:$2 sm:$0xff] %v244
        %s910 = scalar_lea.vmem [#allocation1], 32
        %911 = vst [vmem:[%s910] ss:$2 sm:$0xff] %v245
        %v912 = vld.sshfl [vmem:[#allocation1 + $0x8] sm:$0xff pattern:$0x75316420]
        %v913 = vld.sshfl [vmem:[#allocation1 + $0x10] sm:$0xff pattern:$0x75316420]
        %v914 = vld.sshfl [vmem:[#allocation1 + $0x18] sm:$0xff pattern:$0x75316420]
        %v915 = vld.sshfl [vmem:[#allocation1 + $0x20] sm:$0xff pattern:$0x75316420]
        %916 = vrot.lane.b32.xlu0 %v912, 56
        %v917 = vpop.permute.xlu0 %916
        %918 = vrot.lane.b32.xlu0 %v913, 56
        %v919 = vpop.permute.xlu0 %918
        %920 = vrot.lane.b32.xlu0 %v914, 56
        %v921 = vpop.permute.xlu0 %920
        %922 = vrot.lane.b32.xlu0 %v915, 56
        %v923 = vpop.permute.xlu0 %922
        %vm924 = vcmask 457728
        %v925 = vsel %vm924, %v917, %v919
        %v926 = vsel %vm924, %v919, %v921
        %v927 = vsel %vm924, %v921, %v923
        %931 = vst [vmem:[#allocation2 + $0x138] sm:$0xf] %v925
        %932 = vst [vmem:[#allocation2 + $0x140] sm:$0xf] %v926
        %933 = vst [vmem:[#allocation2 + $0x148] sm:$0xf] %v927
        %v934 = vld [vmem:[%s1] sm:$0xff]
        %v935 = vld [vmem:[%s1 + $0x8] sm:$0xf]
        %v936 = vld [vmem:[#allocation2] sm:$0xff]
        %v937 = vld [vmem:[#allocation2 + $0x8] sm:$0xff]
        %v938 = vld [vmem:[#allocation2 + $0x10] sm:$0xff]
        %v939 = vld [vmem:[#allocation2 + $0x18] sm:$0xff]
        %v940 = vld [vmem:[#allocation2 + $0x20] sm:$0xff]
        %v941 = vld [vmem:[#allocation2 + $0x28] sm:$0xff]
        %v942 = vld [vmem:[#allocation2 + $0x30] sm:$0xff]
        %v943 = vld [vmem:[#allocation2 + $0x38] sm:$0xff]
        %v944 = vld [vmem:[#allocation2 + $0x40] sm:$0xff]
        %v945 = vld [vmem:[#allocation2 + $0x48] sm:$0xff]
        %v946 = vld [vmem:[#allocation2 + $0x50] sm:$0xff]
        %v947 = vld [vmem:[#allocation2 + $0x58] sm:$0xff]
        %v948 = vld [vmem:[#allocation2 + $0x60] sm:$0xff]
        %v949 = vld [vmem:[#allocation2 + $0x68] sm:$0xff]
        %v950 = vld [vmem:[#allocation2 + $0x70] sm:$0xff]
        %v951 = vld [vmem:[#allocation2 + $0x78] sm:$0xff]
        %v952 = vld [vmem:[#allocation2 + $0x80] sm:$0xff]
        %v953 = vld [vmem:[#allocation2 + $0x88] sm:$0xff]
        %v954 = vld [vmem:[#allocation2 + $0x90] sm:$0xff]
        %v955 = vld [vmem:[#allocation2 + $0x98] sm:$0xff]
        %v956 = vld [vmem:[#allocation2 + $0xa0] sm:$0xff]
        %v957 = vld [vmem:[#allocation2 + $0xa8] sm:$0xff]
        %v958 = vld [vmem:[#allocation2 + $0xb0] sm:$0xff]
        %v959 = vld [vmem:[#allocation2 + $0xb8] sm:$0xff]
        %v960 = vld [vmem:[#allocation2 + $0xc0] sm:$0xff]
        %v961 = vld [vmem:[#allocation2 + $0xc8] sm:$0xff]
        %v962 = vld [vmem:[#allocation2 + $0xd0] sm:$0xff]
        %v963 = vld [vmem:[#allocation2 + $0xd8] sm:$0xff]
        %v964 = vld [vmem:[#allocation2 + $0xe0] sm:$0xff]
        %v965 = vld [vmem:[#allocation2 + $0xe8] sm:$0xff]
        %v966 = vld [vmem:[#allocation2 + $0xf0] sm:$0xff]
        %v967 = vld [vmem:[#allocation2 + $0xf8] sm:$0xff]
        %v968 = vld [vmem:[#allocation2 + $0x100] sm:$0xff]
        %v969 = vld [vmem:[#allocation2 + $0x108] sm:$0xff]
        %v970 = vld [vmem:[#allocation2 + $0x110] sm:$0xff]
        %v971 = vld [vmem:[#allocation2 + $0x118] sm:$0xff]
        %v972 = vld [vmem:[#allocation2 + $0x120] sm:$0xff]
        %v973 = vld [vmem:[#allocation2 + $0x128] sm:$0xff]
        %v974 = vld [vmem:[#allocation2 + $0x130] sm:$0xff]
        %v975 = vld [vmem:[#allocation2 + $0x138] sm:$0xf]
        %v976 = vld [vmem:[#allocation2 + $0x140] sm:$0xf]
        %v977 = vld [vmem:[#allocation2 + $0x148] sm:$0xf]
        %v978 = vld [vmem:[%s2] sm:$0xff]
        %v979 = vld [vmem:[%s2 + $0x8] sm:$0xf]
        %981 = vset.pattern.permute.xlu0 0
        %982 = vperm.xlu0 %981, %v978
        %v983 = vpop.permute.xlu0 %982
        %986 = vset.pattern.permute.xlu0 0
        %987 = vperm.xlu0 %986, %v979
        %v988 = vpop.permute.xlu0 %987
        %v991 = vsel %vm675, %v934, 0
        %v994 = vsel %vm675, %v935, 0
        %vm996 = vcmask 1043456
        %v998 = vsel %vm996, %v975, 0
        %v1001 = vsel %vm996, %v976, 0
        %v1004 = vsel %vm996, %v977, 0
        %1006 = vmatpush.msra.mxu0 0.0
        %1007 = vmatpush.msra.mxu0 0.0
        %1008 = vmatpush.msra.mxu0 %v998
        %1009 = vmatpush.msra.mxu0 %v972
        %1010 = vmatpush.msra.mxu0 %v969
        %1011 = vmatpush.msra.mxu0 %v966
        %1012 = vmatpush.msra.mxu0 %v963
        %1013 = vmatpush.msra.mxu0 %v960
        %1014 = vmatpush.msra.mxu0 %v957
        %1015 = vmatpush.msra.mxu0 %v954
        %1016 = vmatpush.msra.mxu0 %v951
        %1017 = vmatpush.msra.mxu0 %v948
        %1018 = vmatpush.msra.mxu0 %v945
        %1019 = vmatpush.msra.mxu0 %v942
        %1020 = vmatpush.msra.mxu0 %v939
        %1021 = vmatpush.msra.mxu0 %v936
        %1022 = vmatmul.f32.gmra.mxu0 %v991
        %v1023 = vpop.f32.mrf.mxu0
        %v1024 = vadd.f32 %v983, %v1023
        %1025 = vmatmul.f32.gmra.mxu0 %v994
        %v1026 = vpop.f32.mrf.mxu0
        %v1027 = vadd.f32 %v988, %v1026
        %1028 = vdwg.mxu0
        %1029 = vmatpush.msra.mxu0 0.0
        %1030 = vmatpush.msra.mxu0 0.0
        %1031 = vmatpush.msra.mxu0 %v1001
        %1032 = vmatpush.msra.mxu0 %v973
        %1033 = vmatpush.msra.mxu0 %v970
        %1034 = vmatpush.msra.mxu0 %v967
        %1035 = vmatpush.msra.mxu0 %v964
        %1036 = vmatpush.msra.mxu0 %v961
        %1037 = vmatpush.msra.mxu0 %v958
        %1038 = vmatpush.msra.mxu0 %v955
        %1039 = vmatpush.msra.mxu0 %v952
        %1040 = vmatpush.msra.mxu0 %v949
        %1041 = vmatpush.msra.mxu0 %v946
        %1042 = vmatpush.msra.mxu0 %v943
        %1043 = vmatpush.msra.mxu0 %v940
        %1044 = vmatpush.msra.mxu0 %v937
        %1045 = vmatmul.f32.gmra.mxu0 %v991
        %v1046 = vpop.f32.mrf.mxu0
        %v1047 = vadd.f32 %v983, %v1046
        %1048 = vmatmul.f32.gmra.mxu0 %v994
        %v1049 = vpop.f32.mrf.mxu0
        %v1050 = vadd.f32 %v988, %v1049
        %1051 = vdwg.mxu0
        %1052 = vmatpush.msra.mxu0 0.0
        %1053 = vmatpush.msra.mxu0 0.0
        %1054 = vmatpush.msra.mxu0 %v1004
        %1055 = vmatpush.msra.mxu0 %v974
        %1056 = vmatpush.msra.mxu0 %v971
        %1057 = vmatpush.msra.mxu0 %v968
        %1058 = vmatpush.msra.mxu0 %v965
        %1059 = vmatpush.msra.mxu0 %v962
        %1060 = vmatpush.msra.mxu0 %v959
        %1061 = vmatpush.msra.mxu0 %v956
        %1062 = vmatpush.msra.mxu0 %v953
        %1063 = vmatpush.msra.mxu0 %v950
        %1064 = vmatpush.msra.mxu0 %v947
        %1065 = vmatpush.msra.mxu0 %v944
        %1066 = vmatpush.msra.mxu0 %v941
        %1067 = vmatpush.msra.mxu0 %v938
        %1068 = vmatmul.f32.gmra.mxu0 %v991
        %v1069 = vpop.f32.mrf.mxu0
        %v1070 = vadd.f32 %v983, %v1069
        %1071 = vmatmul.f32.gmra.mxu0 %v994
        %v1072 = vpop.f32.mrf.mxu0
        %v1073 = vadd.f32 %v988, %v1072
        %1074 = vdwg.mxu0
        %v1075 = vmax.f32 %v1024, 0.0
        %v1076 = vmax.f32 %v1047, 0.0
        %v1077 = vmax.f32 %v1070, 0.0
        %v1078 = vmax.f32 %v1027, 0.0
        %v1079 = vmax.f32 %v1050, 0.0
        %v1080 = vmax.f32 %v1073, 0.0
        %v1081 = vld [vmem:[%s3] sm:$0xf]
        %v1082 = vld [vmem:[%s4] sm:$0xf]
        %1084 = vset.pattern.permute.xlu0 0
        %1085 = vperm.xlu0 %1084, %v1082
        %v1086 = vpop.permute.xlu0 %1085
        %vm1088 = vcmask 97280
        %v1090 = vsel %vm1088, %v1081, 0
        %v1093 = vsel %vm996, %v1078, 0
        %v1096 = vsel %vm996, %v1079, 0
        %v1099 = vsel %vm996, %v1080, 0
        %1101 = vmatpush.msra.mxu0 0.0
        %1102 = vmatpush.msra.mxu0 0.0
        %1103 = vmatpush.msra.mxu0 0.0
        %1104 = vmatpush.msra.mxu0 0.0
        %1105 = vmatpush.msra.mxu0 0.0
        %1106 = vmatpush.msra.mxu0 0.0
        %1107 = vmatpush.msra.mxu0 0.0
        %1108 = vmatpush.msra.mxu0 0.0
        %1109 = vmatpush.msra.mxu0 0.0
        %1110 = vmatpush.msra.mxu0 0.0
        %1111 = vmatpush.msra.mxu0 0.0
        %1112 = vmatpush.msra.mxu0 0.0
        %1113 = vmatpush.msra.mxu0 0.0
        %1114 = vmatpush.msra.mxu0 0.0
        %1115 = vmatpush.msra.mxu0 %v1093
        %1116 = vmatpush.msra.mxu0 %v1075
        %1117 = vmatmul.f32.gmra.mxu0 %v1090
        %v1118 = vpop.f32.mrf.mxu0
        %v1119 = vadd.f32 %v1086, %v1118
        %1120 = vdwg.mxu0
        %1121 = vmatpush.msra.mxu0 0.0
        %1122 = vmatpush.msra.mxu0 0.0
        %1123 = vmatpush.msra.mxu0 0.0
        %1124 = vmatpush.msra.mxu0 0.0
        %1125 = vmatpush.msra.mxu0 0.0
        %1126 = vmatpush.msra.mxu0 0.0
        %1127 = vmatpush.msra.mxu0 0.0
        %1128 = vmatpush.msra.mxu0 0.0
        %1129 = vmatpush.msra.mxu0 0.0
        %1130 = vmatpush.msra.mxu0 0.0
        %1131 = vmatpush.msra.mxu0 0.0
        %1132 = vmatpush.msra.mxu0 0.0
        %1133 = vmatpush.msra.mxu0 0.0
        %1134 = vmatpush.msra.mxu0 0.0
        %1135 = vmatpush.msra.mxu0 %v1096
        %1136 = vmatpush.msra.mxu0 %v1076
        %1137 = vmatmul.f32.gmra.mxu0 %v1090
        %v1138 = vpop.f32.mrf.mxu0
        %v1139 = vadd.f32 %v1086, %v1138
        %1140 = vdwg.mxu0
        %1141 = vmatpush.msra.mxu0 0.0
        %1142 = vmatpush.msra.mxu0 0.0
        %1143 = vmatpush.msra.mxu0 0.0
        %1144 = vmatpush.msra.mxu0 0.0
        %1145 = vmatpush.msra.mxu0 0.0
        %1146 = vmatpush.msra.mxu0 0.0
        %1147 = vmatpush.msra.mxu0 0.0
        %1148 = vmatpush.msra.mxu0 0.0
        %1149 = vmatpush.msra.mxu0 0.0
        %1150 = vmatpush.msra.mxu0 0.0
        %1151 = vmatpush.msra.mxu0 0.0
        %1152 = vmatpush.msra.mxu0 0.0
        %1153 = vmatpush.msra.mxu0 0.0
        %1154 = vmatpush.msra.mxu0 0.0
        %1155 = vmatpush.msra.mxu0 %v1099
        %1156 = vmatpush.msra.mxu0 %v1077
        %1157 = vmatmul.f32.gmra.mxu0 %v1090
        %v1158 = vpop.f32.mrf.mxu0
        %v1159 = vadd.f32 %v1086, %v1158
        %1160 = vdwg.mxu0
        %v1161 = vmax.f32 %v1119, 0.0
        %v1162 = vmax.f32 %v1139, 0.0
        %v1163 = vmax.f32 %v1159, 0.0
        %v1166 = vrot.slane %v1162, 4
        %v1167 = vsel %vm996, %v1161, %v1166
        %1169 = vst [vmem:[%s242] sm:$0xff] %v1167
        %1170 = vst [vmem:[%s242 + $0x8] sm:$0xf] %v1163
        %s1171 = sand.u32 %s140, 1
        %s1172 = scalar_lea.sflag [#allocation5], %s1171
        %s1173 = sand.u32 %s140, 1
        %s1174 = smul.addr %s1173, 12
        %s1175 = scalar_lea.vmem [#allocation6], %s1174
        // Predicated region
        $region45: #{tpu_custom_call.1} parent=39 // pred_check
          %p1176 = pneg %p150
        $region46: #{tpu_custom_call.1} parent=39 // pred_check_branch
          %1178 = sbr.rel (%p1176) target = $region48
        $region47: #{tpu_custom_call.1} parent=39 // pred_region
          %1180 = vsyncadd %s1172, 0
          %s1181 = smul.addr %s22, 3
          %s1182 = smul.addr %s1181, 4
          %s1183 = scalar_lea.hbm %s5, %s1182
          %s1185 = sshll.u32 %s1175, 4
          %s1186 = int_to_ptr.vmem [resolvable:$true] %s1185
          %s1187 = sshll.u32 %s1183, 4
          %s1188 = int_to_ptr.hbm [resolvable:$true] %s1187
          %1190 = dma.vmem_to_hbm [thread:$0]  %s1186, 192, %s1188, %s1172
        $region48: #{tpu_custom_call.1} parent=39 // pred_fallthru
          _
      $region40: #{tpu_custom_call.1} parent=5 // pred_fallthru
        _
      %p1191 = scmp.le.s32.totalorder 2, %s17
      // Predicated region
      $region49: #{tpu_custom_call.1} parent=5 // pred_check
        %p1192 = pneg %p1191
      $region50: #{tpu_custom_call.1} parent=5 // pred_check_branch
        %1194 = sbr.rel (%p1192) target = $region52
      $region51: #{tpu_custom_call.1} parent=5 // pred_region
        %s1195 = ssub.s32 %s17, 2
        // Predicated region
        $region53: #{tpu_custom_call.1} parent=51 // pred_check
          %p1196 = pneg %p156
        $region54: #{tpu_custom_call.1} parent=51 // pred_check_branch
          %1198 = sbr.rel (%p1196) target = $region56
        $region55: #{tpu_custom_call.1} parent=51 // pred_region
          %s1199 = sand.u32 %s141, 1
          %s1200 = scalar_lea.sflag [#allocation5], %s1199
          %s1201 = sand.u32 %s141, 1
          %s1202 = smul.addr %s1201, 12
          %s1203 = scalar_lea.vmem [#allocation6], %s1202
          %1205 = dma.done %s1200, 192
        $region56: #{tpu_custom_call.1} parent=51 // pred_fallthru
          _
      $region52: #{tpu_custom_call.1} parent=5 // pred_fallthru
        _
    $region6: #{tpu_custom_call.1} parent=1 // loop_footer
      %s21 = sadd.s32 1, %s17
    $region7: #{tpu_custom_call.1} parent=1 // loop_footer_branch
      %16 = sbr.rel target = $region3
    $region8: #{tpu_custom_call.1} parent=1 // loop_exit
      _
    %1206 = vsyncpa [#allocation4], 1
    %s1207 = scalar_lea.sflag [#allocation4], 1
    %1208 = vsyncpa %s1207, 1
    %1209 = vsyncpa [#allocation5], 1
    %s1210 = scalar_lea.sflag [#allocation5], 1
    %1211 = vsyncpa %s1210, 1

</llo_original>
